<compile_context>
chip_gen: v7x
topology: tpu7x:2x2x1
jax: 0.10.0
libtpu: 0.0.40
codegen_flags: <defaults>
</compile_context>

<pallas_src>
import functools
import math

import jax
import jax.numpy as jnp
from jax.experimental import pallas as pl
from jax.experimental.pallas import tpu as pltpu

_EPS = 1e-5


def _ln2d(x, gamma, beta, eps=_EPS):
    """LayerNorm over the last axis of a 2-D tile (gamma/beta are (1, D))."""
    mu = jnp.mean(x, axis=-1, keepdims=True)
    var = jnp.mean(jnp.square(x - mu), axis=-1, keepdims=True)
    return (x - mu) * jax.lax.rsqrt(var + eps) * gamma + beta


# -----------------------------------------------------------------------------------
# EncoderLayer: attention + FFN fused into one kernel (one batch element per grid step)
# -----------------------------------------------------------------------------------
def _encoder_layer_kernel(x_ref, wq_ref, bq_ref, wk_ref, bk_ref, wv_ref, bv_ref,
                          wo_ref, bo_ref, g1_ref, be1_ref, w1_ref, bf1_ref,
                          w2_ref, bf2_ref, g2_ref, be2_ref,
                          y_ref, attn_ref, *, n_heads, scale):
    x = x_ref[0]                                    # (L, D)
    dh = x.shape[-1] // n_heads

    q = jnp.dot(x, wq_ref[...], preferred_element_type=jnp.float32) + bq_ref[...]
    k = jnp.dot(x, wk_ref[...], preferred_element_type=jnp.float32) + bk_ref[...]
    v = jnp.dot(x, wv_ref[...], preferred_element_type=jnp.float32) + bv_ref[...]
    wo = wo_ref[...]                                # (D, D), loaded once

    attn_out = None
    for h in range(n_heads):                        # trace-time loop over heads
        lo = h * dh
        qh = q[:, lo:lo + dh]                       # (L, dh)
        kh = k[:, lo:lo + dh]
        vh = v[:, lo:lo + dh]
        # scores = qh @ kh^T (contract last dim of both operands)
        s = jax.lax.dot_general(qh, kh, (((1,), (1,)), ((), ())),
                                preferred_element_type=jnp.float32) * scale   # (L, L)
        s = s - jnp.max(s, axis=-1, keepdims=True)
        e = jnp.exp(s)
        p = e / jnp.sum(e, axis=-1, keepdims=True)
        attn_ref[0, h] = p                          # per-head attention probabilities
        oh = jnp.dot(p, vh, preferred_element_type=jnp.float32)                 # (L, dh)
        ch = jnp.dot(oh, wo[lo:lo + dh, :], preferred_element_type=jnp.float32)  # (L, D)
        attn_out = ch if attn_out is None else attn_out + ch
    attn_out = attn_out + bo_ref[...]

    x1 = x + attn_out                               # residual 1
    xn = _ln2d(x1, g1_ref[...], be1_ref[...])       # norm1
    hid = jnp.maximum(
        jnp.dot(xn, w1_ref[...], preferred_element_type=jnp.float32) + bf1_ref[...], 0.0)
    ffn = jnp.dot(hid, w2_ref[...], preferred_element_type=jnp.float32) + bf2_ref[...]
    y_ref[0] = _ln2d(xn + ffn, g2_ref[...], be2_ref[...])   # residual 2 + norm2


def encoder_layer_pallas(x, p, attn_mask=None, tau=None, delta=None):
    # TODO(synk): attn_mask/tau/delta accepted for Encoder-forward parity; unused here.
    del attn_mask, tau, delta
    B, L, D = x.shape
    H = p["n_heads"]
    F = p["w1"].shape[1]
    kern = functools.partial(_encoder_layer_kernel, n_heads=H,
                             scale=1.0 / math.sqrt(D // H))

    def full(shape):
        return pl.BlockSpec(shape, lambda b: (0,) * len(shape))

    y, attn = pl.pallas_call(
        kern,
        out_shape=(jax.ShapeDtypeStruct((B, L, D), jnp.float32),
                   jax.ShapeDtypeStruct((B, H, L, L), jnp.float32)),
        grid=(B,),
        in_specs=[
            pl.BlockSpec((1, L, D), lambda b: (b, 0, 0)),   # x
            full((D, D)), full((1, D)),                      # wq, bq
            full((D, D)), full((1, D)),                      # wk, bk
            full((D, D)), full((1, D)),                      # wv, bv
            full((D, D)), full((1, D)),                      # wo, bo
            full((1, D)), full((1, D)),                      # norm1 gamma / beta
            full((D, F)), full((1, F)),                      # FFN conv1 (1x1)
            full((F, D)), full((1, D)),                      # FFN conv2 (1x1)
            full((1, D)), full((1, D)),                      # norm2 gamma / beta
        ],
        out_specs=(pl.BlockSpec((1, L, D), lambda b: (b, 0, 0)),
                   pl.BlockSpec((1, H, L, L), lambda b: (b, 0, 0, 0))),
        compiler_params=pltpu.CompilerParams(dimension_semantics=("parallel",)),
    )(x, p["wq"], p["bq"], p["wk"], p["bk"], p["wv"], p["bv"],
      p["wo"], p["bo"], p["g1"], p["b1"], p["w1"], p["bf1"],
      p["w2"], p["bf2"], p["g2"], p["b2"])
    return y, attn


# -----------------------------------------------------------------------------------
# ConvLayer: Conv1d(k=3, circular pad) + folded BatchNorm + ELU + MaxPool1d(3, 2, 1)
# -----------------------------------------------------------------------------------
def _conv_layer_kernel(xp_ref, w_ref, sc_ref, sh_ref, o_ref, *, L):
    xc = xp_ref[0]                                  # (L + 2, D) circular-padded sequence
    D = xc.shape[-1]

    acc = None                                      # Conv1d(k=3) as 3 shifted matmuls
    for t in range(3):
        c = jnp.dot(xc[t:t + L, :], w_ref[t], preferred_element_type=jnp.float32)
        acc = c if acc is None else acc + c
    h = acc * sc_ref[...] + sh_ref[...]             # conv bias + BatchNorm folded
    h = jnp.where(h > 0, h, jnp.exp(h) - 1.0)       # ELU (alpha = 1)

    # MaxPool1d(kernel=3, stride=2, padding=1): output row j = max over rows [2j-1, 2j+1].
    pad = jnp.full((1, D), -1e30, dtype=h.dtype)
    hp = jnp.concatenate([pad, h], axis=0)          # (L + 1, D)
    rows = [jnp.max(hp[2 * j:2 * j + 3, :], axis=0, keepdims=True)
            for j in range(L // 2)]
    o_ref[0] = jnp.concatenate(rows, axis=0)


def conv_layer_pallas(x, p):
    B, L, D = x.shape
    assert L % 2 == 0
    OL = L // 2
    # Circular padding (1 each side), matching Conv1d(padding=1, padding_mode='circular').
    xp = jnp.concatenate([x[:, -1:, :], x, x[:, :1, :]], axis=1)
    # Fold conv bias + inference BatchNorm into a single scale/shift.
    scale = p["bn_gamma"] / jnp.sqrt(p["bn_var"] + _EPS)
    shift = p["bn_beta"] - p["bn_mean"] * scale + p["b"] * scale
    kern = functools.partial(_conv_layer_kernel, L=L)
    return pl.pallas_call(
        kern,
        out_shape=jax.ShapeDtypeStruct((B, OL, D), jnp.float32),
        grid=(B,),
        in_specs=[
            pl.BlockSpec((1, L + 2, D), lambda b: (b, 0, 0)),
            pl.BlockSpec((3, D, D), lambda b: (0, 0, 0)),
            pl.BlockSpec((1, D), lambda b: (0, 0)),
            pl.BlockSpec((1, D), lambda b: (0, 0)),
        ],
        out_specs=pl.BlockSpec((1, OL, D), lambda b: (b, 0, 0)),
        compiler_params=pltpu.CompilerParams(dimension_semantics=("parallel",)),
    )(xp, p["w"], scale.reshape(1, D), shift.reshape(1, D))


# -----------------------------------------------------------------------------------
# Final LayerNorm
# -----------------------------------------------------------------------------------
def _layer_norm_kernel(x_ref, g_ref, b_ref, o_ref):
    o_ref[0] = _ln2d(x_ref[0], g_ref[...], b_ref[...])


def layer_norm_pallas(x, p):
    B, L, D = x.shape
    return pl.pallas_call(
        _layer_norm_kernel,
        out_shape=jax.ShapeDtypeStruct((B, L, D), jnp.float32),
        grid=(B,),
        in_specs=[pl.BlockSpec((1, L, D), lambda b: (b, 0, 0)),
                  pl.BlockSpec((1, D), lambda b: (0, 0)),
                  pl.BlockSpec((1, D), lambda b: (0, 0))],
        out_specs=pl.BlockSpec((1, L, D), lambda b: (b, 0, 0)),
        compiler_params=pltpu.CompilerParams(dimension_semantics=("parallel",)),
    )(x, p["g"], p["b"])


# -----------------------------------------------------------------------------------
# Encoder.forward — exact mirror of the PyTorch control flow, sub-layer impls injected
# -----------------------------------------------------------------------------------
def encoder_forward(x, params, attn_layer_fn, conv_layer_fn, norm_fn,
                    attn_mask=None, tau=None, delta=None):
    attns = []
    attn_layers = params["attn_layers"]
    conv_layers = params["conv_layers"]
    if conv_layers is not None:
        for i, (ap, cp) in enumerate(zip(attn_layers, conv_layers)):
            d = delta if i == 0 else None
            x, attn = attn_layer_fn(x, ap, attn_mask=attn_mask, tau=tau, delta=d)
            x = conv_layer_fn(x, cp)
            attns.append(attn)
        x, attn = attn_layer_fn(x, attn_layers[-1], tau=tau, delta=None)
        attns.append(attn)
    else:
        for ap in attn_layers:
            x, attn = attn_layer_fn(x, ap, attn_mask=attn_mask, tau=tau, delta=delta)
            attns.append(attn)
    if params["norm"] is not None:
        x = norm_fn(x, params["norm"])
    return x, attns


# -----------------------------------------------------------------------------------
# Pure-JAX/XLA reference implementations (independent conv / pooling / softmax paths)
# -----------------------------------------------------------------------------------
def _ref_ln(x, gamma, beta, eps=_EPS):
    mu = jnp.mean(x, axis=-1, keepdims=True)
    var = jnp.mean(jnp.square(x - mu), axis=-1, keepdims=True)
    return (x - mu) / jnp.sqrt(var + eps) * gamma + beta


def encoder_layer_ref(x, p, attn_mask=None, tau=None, delta=None):
    del attn_mask, tau, delta
    B, L, D = x.shape
    H = p["n_heads"]
    dh = D // H
    q = (x @ p["wq"] + p["bq"]).reshape(B, L, H, dh)
    k = (x @ p["wk"] + p["bk"]).reshape(B, L, H, dh)
    v = (x @ p["wv"] + p["bv"]).reshape(B, L, H, dh)
    s = jnp.einsum("blhe,bmhe->bhlm", q, k) / math.sqrt(dh)
    a = jax.nn.softmax(s, axis=-1)
    o = jnp.einsum("bhlm,bmhe->blhe", a, v).reshape(B, L, D)
    o = o @ p["wo"] + p["bo"]
    x1 = x + o
    xn = _ref_ln(x1, p["g1"], p["b1"])
    hid = jax.nn.relu(xn @ p["w1"] + p["bf1"])
    ffn = hid @ p["w2"] + p["bf2"]
    return _ref_ln(xn + ffn, p["g2"], p["b2"]), a


def conv_layer_ref(x, p):
    xp = jnp.concatenate([x[:, -1:, :], x, x[:, :1, :]], axis=1)
    y = jax.lax.conv_general_dilated(
        xp, p["w"], window_strides=(1,), padding="VALID",
        dimension_numbers=("NHC", "HIO", "NHC")) + p["b"]
    y = (y - p["bn_mean"]) / jnp.sqrt(p["bn_var"] + _EPS) * p["bn_gamma"] + p["bn_beta"]
    y = jax.nn.elu(y)
    return jax.lax.reduce_window(y, -jnp.inf, jax.lax.max,
                                 window_dimensions=(1, 3, 1), window_strides=(1, 2, 1),
                                 padding=((0, 0), (1, 1), (0, 0)))


def layer_norm_ref(x, p):
    return _ref_ln(x, p["g"], p["b"])


# -----------------------------------------------------------------------------------
# Parameter construction (PyTorch-default-style inits, deterministic)
# -----------------------------------------------------------------------------------
def _linear_init(key, fan_in, fan_out):
    kw, kb = jax.random.split(key)
    bound = 1.0 / math.sqrt(fan_in)
    w = jax.random.uniform(kw, (fan_in, fan_out), jnp.float32, -bound, bound)
    b = jax.random.uniform(kb, (1, fan_out), jnp.float32, -bound, bound)
    return w, b


def _init_attn_layer(key, d_model, n_heads, d_ff):
    ks = jax.random.split(key, 10)
    wq, bq = _linear_init(ks[0], d_model, d_model)
    wk, bk = _linear_init(ks[1], d_model, d_model)
    wv, bv = _linear_init(ks[2], d_model, d_model)
    wo, bo = _linear_init(ks[3], d_model, d_model)
    w1, bf1 = _linear_init(ks[4], d_model, d_ff)
    w2, bf2 = _linear_init(ks[5], d_ff, d_model)
    g1 = 1.0 + 0.1 * jax.random.normal(ks[6], (1, d_model), jnp.float32)
    b1 = 0.1 * jax.random.normal(ks[7], (1, d_model), jnp.float32)
    g2 = 1.0 + 0.1 * jax.random.normal(ks[8], (1, d_model), jnp.float32)
    b2 = 0.1 * jax.random.normal(ks[9], (1, d_model), jnp.float32)
    return dict(n_heads=n_heads, wq=wq, bq=bq, wk=wk, bk=bk, wv=wv, bv=bv,
                wo=wo, bo=bo, g1=g1, b1=b1, w1=w1, bf1=bf1, w2=w2, bf2=bf2,
                g2=g2, b2=b2)


def _init_conv_layer(key, d_model):
    ks = jax.random.split(key, 4)
    bound = 1.0 / math.sqrt(3 * d_model)
    w = jax.random.uniform(ks[0], (3, d_model, d_model), jnp.float32, -bound, bound)
    b = jax.random.uniform(ks[1], (d_model,), jnp.float32, -bound, bound)
    return dict(w=w, b=b,
                bn_gamma=1.0 + 0.1 * jax.random.normal(ks[2], (d_model,), jnp.float32),
                bn_beta=0.1 * jax.random.normal(ks[3], (d_model,), jnp.float32),
                bn_mean=jnp.zeros((d_model,), jnp.float32),
                bn_var=jnp.ones((d_model,), jnp.float32))


def init_encoder_params(key, d_model, n_heads, d_ff, n_attn_layers, n_conv_layers):
    ks = jax.random.split(key, n_attn_layers + n_conv_layers + 1)
    attn_layers = [_init_attn_layer(ks[i], d_model, n_heads, d_ff)
                   for i in range(n_attn_layers)]
    conv_layers = ([_init_conv_layer(ks[n_attn_layers + i], d_model)
                    for i in range(n_conv_layers)] if n_conv_layers > 0 else None)
    kng, knb = jax.random.split(ks[-1])
    norm = dict(g=1.0 + 0.1 * jax.random.normal(kng, (1, d_model), jnp.float32),
                b=0.1 * jax.random.normal(knb, (1, d_model), jnp.float32))
    return dict(attn_layers=attn_layers, conv_layers=conv_layers, norm=norm)


if __name__ == "__main__":
    key = jax.random.PRNGKey(0)
    kx, kp = jax.random.split(key)

    B, L, D, H, F = 2, 8, 32, 4, 64            # batch, seq, d_model, heads, d_ff
    x = jax.random.normal(kx, (B, L, D), jnp.float32)
    params = init_encoder_params(kp, d_model=D, n_heads=H, d_ff=F,
                                 n_attn_layers=2, n_conv_layers=1)

    # Pallas path: 2 encoder layers + 1 conv layer + final LayerNorm.
    y, attns = encoder_forward(x, params, encoder_layer_pallas, conv_layer_pallas,
                               layer_norm_pallas)
    y = jax.block_until_ready(y)

    # Pure-JAX reference path (run at highest matmul precision).
    with jax.default_matmul_precision("highest"):
        y_ref, attns_ref = encoder_forward(x, params, encoder_layer_ref, conv_layer_ref,
                                           layer_norm_ref)

    assert y.shape == (B, L // 2, D), y.shape
    assert len(attns) == len(attns_ref) == 2

    # Tolerance covers possible MXU-pass vs XLA default-precision f32 matmul differences;
    # a genuine indexing/fusion bug would produce O(1) errors on these normalized outputs.
    assert jnp.allclose(y, y_ref, atol=2e-2, rtol=2e-2), float(
        jnp.max(jnp.abs(y - y_ref)))
    for a, ar in zip(attns, attns_ref):
        assert a.shape == ar.shape, (a.shape, ar.shape)
        assert jnp.allclose(a, ar, atol=2e-2, rtol=2e-2), float(
            jnp.max(jnp.abs(a - ar)))

    print("KERNEL_OK")
</pallas_src>

<mosaic_0001>
module attributes {stable_mosaic.version = 11 : i64} {
  func.func @_encoder_layer_kernel(%arg0: i32, %arg1: memref<1x8x32xf32, #tpu.memory_space<vmem>>, %arg2: memref<32x32xf32, #tpu.memory_space<vmem>>, %arg3: memref<1x32xf32, #tpu.memory_space<vmem>>, %arg4: memref<32x32xf32, #tpu.memory_space<vmem>>, %arg5: memref<1x32xf32, #tpu.memory_space<vmem>>, %arg6: memref<32x32xf32, #tpu.memory_space<vmem>>, %arg7: memref<1x32xf32, #tpu.memory_space<vmem>>, %arg8: memref<32x32xf32, #tpu.memory_space<vmem>>, %arg9: memref<1x32xf32, #tpu.memory_space<vmem>>, %arg10: memref<1x32xf32, #tpu.memory_space<vmem>>, %arg11: memref<1x32xf32, #tpu.memory_space<vmem>>, %arg12: memref<32x64xf32, #tpu.memory_space<vmem>>, %arg13: memref<1x64xf32, #tpu.memory_space<vmem>>, %arg14: memref<64x32xf32, #tpu.memory_space<vmem>>, %arg15: memref<1x32xf32, #tpu.memory_space<vmem>>, %arg16: memref<1x32xf32, #tpu.memory_space<vmem>>, %arg17: memref<1x32xf32, #tpu.memory_space<vmem>>, %arg18: memref<1x8x32xf32, #tpu.memory_space<vmem>>, %arg19: memref<1x4x8x8xf32, #tpu.memory_space<vmem>>) attributes {dimension_semantics = [#tpu.dimension_semantics<parallel>], iteration_bounds = array<i64: 2>, scalar_prefetch = 0 : i64, scratch_operands = 0 : i64, tpu.core_type = #tpu.core_type<tc>, window_params = [{transform_indices = @transform_0, window_bounds = array<i64: 1, 8, 32>}, {pipeline_mode = #tpu.pipeline_mode<synchronous>, transform_indices = @transform_1, window_bounds = array<i64: 32, 32>}, {pipeline_mode = #tpu.pipeline_mode<synchronous>, transform_indices = @transform_2, window_bounds = array<i64: 1, 32>}, {pipeline_mode = #tpu.pipeline_mode<synchronous>, transform_indices = @transform_3, window_bounds = array<i64: 32, 32>}, {pipeline_mode = #tpu.pipeline_mode<synchronous>, transform_indices = @transform_4, window_bounds = array<i64: 1, 32>}, {pipeline_mode = #tpu.pipeline_mode<synchronous>, transform_indices = @transform_5, window_bounds = array<i64: 32, 32>}, {pipeline_mode = #tpu.pipeline_mode<synchronous>, transform_indices = @transform_6, window_bounds = array<i64: 1, 32>}, {pipeline_mode = #tpu.pipeline_mode<synchronous>, transform_indices = @transform_7, window_bounds = array<i64: 32, 32>}, {pipeline_mode = #tpu.pipeline_mode<synchronous>, transform_indices = @transform_8, window_bounds = array<i64: 1, 32>}, {pipeline_mode = #tpu.pipeline_mode<synchronous>, transform_indices = @transform_9, window_bounds = array<i64: 1, 32>}, {pipeline_mode = #tpu.pipeline_mode<synchronous>, transform_indices = @transform_10, window_bounds = array<i64: 1, 32>}, {pipeline_mode = #tpu.pipeline_mode<synchronous>, transform_indices = @transform_11, window_bounds = array<i64: 32, 64>}, {pipeline_mode = #tpu.pipeline_mode<synchronous>, transform_indices = @transform_12, window_bounds = array<i64: 1, 64>}, {pipeline_mode = #tpu.pipeline_mode<synchronous>, transform_indices = @transform_13, window_bounds = array<i64: 64, 32>}, {pipeline_mode = #tpu.pipeline_mode<synchronous>, transform_indices = @transform_14, window_bounds = array<i64: 1, 32>}, {pipeline_mode = #tpu.pipeline_mode<synchronous>, transform_indices = @transform_15, window_bounds = array<i64: 1, 32>}, {pipeline_mode = #tpu.pipeline_mode<synchronous>, transform_indices = @transform_16, window_bounds = array<i64: 1, 32>}, {transform_indices = @transform_17, window_bounds = array<i64: 1, 8, 32>}, {transform_indices = @transform_18, window_bounds = array<i64: 1, 4, 8, 8>}]} {
    %c0 = arith.constant 0 : index
    %c0_0 = arith.constant 0 : index
    %c0_1 = arith.constant 0 : index
    %0 = vector.load %arg1[%c0, %c0_0, %c0_1] : memref<1x8x32xf32, #tpu.memory_space<vmem>>, vector<1x8x32xf32>
    %1 = vector.shape_cast %0 : vector<1x8x32xf32> to vector<8x32xf32>
    %c0_2 = arith.constant 0 : index
    %c0_3 = arith.constant 0 : index
    %2 = vector.load %arg2[%c0_2, %c0_3] : memref<32x32xf32, #tpu.memory_space<vmem>>, vector<32x32xf32>
    %cst = arith.constant dense<0.000000e+00> : vector<8x32xf32>
    %3 = tpu.matmul %1, %2, %cst {dimension_numbers = #tpu.dot_dimension_numbers<[1], [0], [0], [1], [0, 0, 1, 1], [], []>} : vector<8x32xf32>, vector<32x32xf32>, vector<8x32xf32> -> vector<8x32xf32>
    %c0_4 = arith.constant 0 : index
    %c0_5 = arith.constant 0 : index
    %4 = vector.load %arg3[%c0_4, %c0_5] : memref<1x32xf32, #tpu.memory_space<vmem>>, vector<1x32xf32>
    %5 = vector.broadcast %4 : vector<1x32xf32> to vector<8x32xf32>
    %6 = arith.addf %3, %5 : vector<8x32xf32>
    %c0_6 = arith.constant 0 : index
    %c0_7 = arith.constant 0 : index
    %7 = vector.load %arg4[%c0_6, %c0_7] : memref<32x32xf32, #tpu.memory_space<vmem>>, vector<32x32xf32>
    %cst_8 = arith.constant dense<0.000000e+00> : vector<8x32xf32>
    %8 = tpu.matmul %1, %7, %cst_8 {dimension_numbers = #tpu.dot_dimension_numbers<[1], [0], [0], [1], [0, 0, 1, 1], [], []>} : vector<8x32xf32>, vector<32x32xf32>, vector<8x32xf32> -> vector<8x32xf32>
    %c0_9 = arith.constant 0 : index
    %c0_10 = arith.constant 0 : index
    %9 = vector.load %arg5[%c0_9, %c0_10] : memref<1x32xf32, #tpu.memory_space<vmem>>, vector<1x32xf32>
    %10 = vector.broadcast %9 : vector<1x32xf32> to vector<8x32xf32>
    %11 = arith.addf %8, %10 : vector<8x32xf32>
    %c0_11 = arith.constant 0 : index
    %c0_12 = arith.constant 0 : index
    %12 = vector.load %arg6[%c0_11, %c0_12] : memref<32x32xf32, #tpu.memory_space<vmem>>, vector<32x32xf32>
    %cst_13 = arith.constant dense<0.000000e+00> : vector<8x32xf32>
    %13 = tpu.matmul %1, %12, %cst_13 {dimension_numbers = #tpu.dot_dimension_numbers<[1], [0], [0], [1], [0, 0, 1, 1], [], []>} : vector<8x32xf32>, vector<32x32xf32>, vector<8x32xf32> -> vector<8x32xf32>
    %c0_14 = arith.constant 0 : index
    %c0_15 = arith.constant 0 : index
    %14 = vector.load %arg7[%c0_14, %c0_15] : memref<1x32xf32, #tpu.memory_space<vmem>>, vector<1x32xf32>
    %15 = vector.broadcast %14 : vector<1x32xf32> to vector<8x32xf32>
    %16 = arith.addf %13, %15 : vector<8x32xf32>
    %c0_16 = arith.constant 0 : index
    %c0_17 = arith.constant 0 : index
    %17 = vector.load %arg8[%c0_16, %c0_17] : memref<32x32xf32, #tpu.memory_space<vmem>>, vector<32x32xf32>
    %18 = vector.extract_strided_slice %6 {offsets = [0, 0], sizes = [8, 8], strides = [1, 1]} : vector<8x32xf32> to vector<8x8xf32>
    %19 = vector.extract_strided_slice %11 {offsets = [0, 0], sizes = [8, 8], strides = [1, 1]} : vector<8x32xf32> to vector<8x8xf32>
    %20 = vector.extract_strided_slice %16 {offsets = [0, 0], sizes = [8, 8], strides = [1, 1]} : vector<8x32xf32> to vector<8x8xf32>
    %cst_18 = arith.constant dense<0.000000e+00> : vector<8x8xf32>
    %21 = tpu.matmul %18, %19, %cst_18 {dimension_numbers = #tpu.dot_dimension_numbers<[1], [1], [0], [0], [0, 0, 1, 0], [], []>} : vector<8x8xf32>, vector<8x8xf32>, vector<8x8xf32> -> vector<8x8xf32>
    %cst_19 = arith.constant 0.353553385 : f32
    %22 = vector.broadcast %cst_19 : f32 to vector<8x8xf32>
    %23 = arith.mulf %21, %22 : vector<8x8xf32>
    %cst_20 = arith.constant dense<0xFF800000> : vector<8xf32>
    %24 = vector.multi_reduction <maximumf>, %23, %cst_20 [1] : vector<8x8xf32> to vector<8xf32>
    %25 = vector.shape_cast %24 : vector<8xf32> to vector<8x1xf32>
    %26 = vector.broadcast %25 : vector<8x1xf32> to vector<8x8xf32>
    %27 = arith.subf %23, %26 : vector<8x8xf32>
    %28 = math.exp %27 : vector<8x8xf32>
    %cst_21 = arith.constant dense<0.000000e+00> : vector<8xf32>
    %29 = vector.multi_reduction <add>, %28, %cst_21 [1] : vector<8x8xf32> to vector<8xf32>
    %30 = vector.shape_cast %29 : vector<8xf32> to vector<8x1xf32>
    %31 = vector.broadcast %30 : vector<8x1xf32> to vector<8x8xf32>
    %32 = arith.divf %28, %31 : vector<8x8xf32>
    %c0_22 = arith.constant 0 : index
    %c0_23 = arith.constant 0 : index
    %c0_24 = arith.constant 0 : index
    %c0_25 = arith.constant 0 : index
    %33 = vector.load %arg19[%c0_22, %c0_23, %c0_24, %c0_25] : memref<1x4x8x8xf32, #tpu.memory_space<vmem>>, vector<1x1x8x8xf32>
    %34 = vector.shape_cast %33 : vector<1x1x8x8xf32> to vector<8x8xf32>
    %35 = vector.shape_cast %32 : vector<8x8xf32> to vector<1x1x8x8xf32>
    tpu.vector_store %arg19[%c0_22, %c0_23, %c0_24, %c0_25], %35 {strides = array<i32>} : memref<1x4x8x8xf32, #tpu.memory_space<vmem>>, vector<1x1x8x8xf32>,
    %cst_26 = arith.constant dense<0.000000e+00> : vector<8x8xf32>
    %36 = tpu.matmul %32, %20, %cst_26 {dimension_numbers = #tpu.dot_dimension_numbers<[1], [0], [0], [1], [0, 0, 1, 1], [], []>} : vector<8x8xf32>, vector<8x8xf32>, vector<8x8xf32> -> vector<8x8xf32>
    %37 = vector.extract_strided_slice %17 {offsets = [0, 0], sizes = [8, 32], strides = [1, 1]} : vector<32x32xf32> to vector<8x32xf32>
    %cst_27 = arith.constant dense<0.000000e+00> : vector<8x32xf32>
    %38 = tpu.matmul %36, %37, %cst_27 {dimension_numbers = #tpu.dot_dimension_numbers<[1], [0], [0], [1], [0, 0, 1, 1], [], []>} : vector<8x8xf32>, vector<8x32xf32>, vector<8x32xf32> -> vector<8x32xf32>
    %39 = vector.extract_strided_slice %6 {offsets = [0, 8], sizes = [8, 8], strides = [1, 1]} : vector<8x32xf32> to vector<8x8xf32>
    %40 = vector.extract_strided_slice %11 {offsets = [0, 8], sizes = [8, 8], strides = [1, 1]} : vector<8x32xf32> to vector<8x8xf32>
    %41 = vector.extract_strided_slice %16 {offsets = [0, 8], sizes = [8, 8], strides = [1, 1]} : vector<8x32xf32> to vector<8x8xf32>
    %cst_28 = arith.constant dense<0.000000e+00> : vector<8x8xf32>
    %42 = tpu.matmul %39, %40, %cst_28 {dimension_numbers = #tpu.dot_dimension_numbers<[1], [1], [0], [0], [0, 0, 1, 0], [], []>} : vector<8x8xf32>, vector<8x8xf32>, vector<8x8xf32> -> vector<8x8xf32>
    %cst_29 = arith.constant 0.353553385 : f32
    %43 = vector.broadcast %cst_29 : f32 to vector<8x8xf32>
    %44 = arith.mulf %42, %43 : vector<8x8xf32>
    %cst_30 = arith.constant dense<0xFF800000> : vector<8xf32>
    %45 = vector.multi_reduction <maximumf>, %44, %cst_30 [1] : vector<8x8xf32> to vector<8xf32>
    %46 = vector.shape_cast %45 : vector<8xf32> to vector<8x1xf32>
    %47 = vector.broadcast %46 : vector<8x1xf32> to vector<8x8xf32>
    %48 = arith.subf %44, %47 : vector<8x8xf32>
    %49 = math.exp %48 : vector<8x8xf32>
    %cst_31 = arith.constant dense<0.000000e+00> : vector<8xf32>
    %50 = vector.multi_reduction <add>, %49, %cst_31 [1] : vector<8x8xf32> to vector<8xf32>
    %51 = vector.shape_cast %50 : vector<8xf32> to vector<8x1xf32>
    %52 = vector.broadcast %51 : vector<8x1xf32> to vector<8x8xf32>
    %53 = arith.divf %49, %52 : vector<8x8xf32>
    %c0_32 = arith.constant 0 : index
    %c1 = arith.constant 1 : index
    %c0_33 = arith.constant 0 : index
    %c0_34 = arith.constant 0 : index
    %54 = vector.load %arg19[%c0_32, %c1, %c0_33, %c0_34] : memref<1x4x8x8xf32, #tpu.memory_space<vmem>>, vector<1x1x8x8xf32>
    %55 = vector.shape_cast %54 : vector<1x1x8x8xf32> to vector<8x8xf32>
    %56 = vector.shape_cast %53 : vector<8x8xf32> to vector<1x1x8x8xf32>
    tpu.vector_store %arg19[%c0_32, %c1, %c0_33, %c0_34], %56 {strides = array<i32>} : memref<1x4x8x8xf32, #tpu.memory_space<vmem>>, vector<1x1x8x8xf32>,
    %cst_35 = arith.constant dense<0.000000e+00> : vector<8x8xf32>
    %57 = tpu.matmul %53, %41, %cst_35 {dimension_numbers = #tpu.dot_dimension_numbers<[1], [0], [0], [1], [0, 0, 1, 1], [], []>} : vector<8x8xf32>, vector<8x8xf32>, vector<8x8xf32> -> vector<8x8xf32>
    %58 = vector.extract_strided_slice %17 {offsets = [8, 0], sizes = [8, 32], strides = [1, 1]} : vector<32x32xf32> to vector<8x32xf32>
    %cst_36 = arith.constant dense<0.000000e+00> : vector<8x32xf32>
    %59 = tpu.matmul %57, %58, %cst_36 {dimension_numbers = #tpu.dot_dimension_numbers<[1], [0], [0], [1], [0, 0, 1, 1], [], []>} : vector<8x8xf32>, vector<8x32xf32>, vector<8x32xf32> -> vector<8x32xf32>
    %60 = arith.addf %38, %59 : vector<8x32xf32>
    %61 = vector.extract_strided_slice %6 {offsets = [0, 16], sizes = [8, 8], strides = [1, 1]} : vector<8x32xf32> to vector<8x8xf32>
    %62 = vector.extract_strided_slice %11 {offsets = [0, 16], sizes = [8, 8], strides = [1, 1]} : vector<8x32xf32> to vector<8x8xf32>
    %63 = vector.extract_strided_slice %16 {offsets = [0, 16], sizes = [8, 8], strides = [1, 1]} : vector<8x32xf32> to vector<8x8xf32>
    %cst_37 = arith.constant dense<0.000000e+00> : vector<8x8xf32>
    %64 = tpu.matmul %61, %62, %cst_37 {dimension_numbers = #tpu.dot_dimension_numbers<[1], [1], [0], [0], [0, 0, 1, 0], [], []>} : vector<8x8xf32>, vector<8x8xf32>, vector<8x8xf32> -> vector<8x8xf32>
    %cst_38 = arith.constant 0.353553385 : f32
    %65 = vector.broadcast %cst_38 : f32 to vector<8x8xf32>
    %66 = arith.mulf %64, %65 : vector<8x8xf32>
    %cst_39 = arith.constant dense<0xFF800000> : vector<8xf32>
    %67 = vector.multi_reduction <maximumf>, %66, %cst_39 [1] : vector<8x8xf32> to vector<8xf32>
    %68 = vector.shape_cast %67 : vector<8xf32> to vector<8x1xf32>
    %69 = vector.broadcast %68 : vector<8x1xf32> to vector<8x8xf32>
    %70 = arith.subf %66, %69 : vector<8x8xf32>
    %71 = math.exp %70 : vector<8x8xf32>
    %cst_40 = arith.constant dense<0.000000e+00> : vector<8xf32>
    %72 = vector.multi_reduction <add>, %71, %cst_40 [1] : vector<8x8xf32> to vector<8xf32>
    %73 = vector.shape_cast %72 : vector<8xf32> to vector<8x1xf32>
    %74 = vector.broadcast %73 : vector<8x1xf32> to vector<8x8xf32>
    %75 = arith.divf %71, %74 : vector<8x8xf32>
    %c0_41 = arith.constant 0 : index
    %c2 = arith.constant 2 : index
    %c0_42 = arith.constant 0 : index
    %c0_43 = arith.constant 0 : index
    %76 = vector.load %arg19[%c0_41, %c2, %c0_42, %c0_43] : memref<1x4x8x8xf32, #tpu.memory_space<vmem>>, vector<1x1x8x8xf32>
    %77 = vector.shape_cast %76 : vector<1x1x8x8xf32> to vector<8x8xf32>
    %78 = vector.shape_cast %75 : vector<8x8xf32> to vector<1x1x8x8xf32>
    tpu.vector_store %arg19[%c0_41, %c2, %c0_42, %c0_43], %78 {strides = array<i32>} : memref<1x4x8x8xf32, #tpu.memory_space<vmem>>, vector<1x1x8x8xf32>,
    %cst_44 = arith.constant dense<0.000000e+00> : vector<8x8xf32>
    %79 = tpu.matmul %75, %63, %cst_44 {dimension_numbers = #tpu.dot_dimension_numbers<[1], [0], [0], [1], [0, 0, 1, 1], [], []>} : vector<8x8xf32>, vector<8x8xf32>, vector<8x8xf32> -> vector<8x8xf32>
    %80 = vector.extract_strided_slice %17 {offsets = [16, 0], sizes = [8, 32], strides = [1, 1]} : vector<32x32xf32> to vector<8x32xf32>
    %cst_45 = arith.constant dense<0.000000e+00> : vector<8x32xf32>
    %81 = tpu.matmul %79, %80, %cst_45 {dimension_numbers = #tpu.dot_dimension_numbers<[1], [0], [0], [1], [0, 0, 1, 1], [], []>} : vector<8x8xf32>, vector<8x32xf32>, vector<8x32xf32> -> vector<8x32xf32>
    %82 = arith.addf %60, %81 : vector<8x32xf32>
    %83 = vector.extract_strided_slice %6 {offsets = [0, 24], sizes = [8, 8], strides = [1, 1]} : vector<8x32xf32> to vector<8x8xf32>
    %84 = vector.extract_strided_slice %11 {offsets = [0, 24], sizes = [8, 8], strides = [1, 1]} : vector<8x32xf32> to vector<8x8xf32>
    %85 = vector.extract_strided_slice %16 {offsets = [0, 24], sizes = [8, 8], strides = [1, 1]} : vector<8x32xf32> to vector<8x8xf32>
    %cst_46 = arith.constant dense<0.000000e+00> : vector<8x8xf32>
    %86 = tpu.matmul %83, %84, %cst_46 {dimension_numbers = #tpu.dot_dimension_numbers<[1], [1], [0], [0], [0, 0, 1, 0], [], []>} : vector<8x8xf32>, vector<8x8xf32>, vector<8x8xf32> -> vector<8x8xf32>
    %cst_47 = arith.constant 0.353553385 : f32
    %87 = vector.broadcast %cst_47 : f32 to vector<8x8xf32>
    %88 = arith.mulf %86, %87 : vector<8x8xf32>
    %cst_48 = arith.constant dense<0xFF800000> : vector<8xf32>
    %89 = vector.multi_reduction <maximumf>, %88, %cst_48 [1] : vector<8x8xf32> to vector<8xf32>
    %90 = vector.shape_cast %89 : vector<8xf32> to vector<8x1xf32>
    %91 = vector.broadcast %90 : vector<8x1xf32> to vector<8x8xf32>
    %92 = arith.subf %88, %91 : vector<8x8xf32>
    %93 = math.exp %92 : vector<8x8xf32>
    %cst_49 = arith.constant dense<0.000000e+00> : vector<8xf32>
    %94 = vector.multi_reduction <add>, %93, %cst_49 [1] : vector<8x8xf32> to vector<8xf32>
    %95 = vector.shape_cast %94 : vector<8xf32> to vector<8x1xf32>
    %96 = vector.broadcast %95 : vector<8x1xf32> to vector<8x8xf32>
    %97 = arith.divf %93, %96 : vector<8x8xf32>
    %c0_50 = arith.constant 0 : index
    %c3 = arith.constant 3 : index
    %c0_51 = arith.constant 0 : index
    %c0_52 = arith.constant 0 : index
    %98 = vector.load %arg19[%c0_50, %c3, %c0_51, %c0_52] : memref<1x4x8x8xf32, #tpu.memory_space<vmem>>, vector<1x1x8x8xf32>
    %99 = vector.shape_cast %98 : vector<1x1x8x8xf32> to vector<8x8xf32>
    %100 = vector.shape_cast %97 : vector<8x8xf32> to vector<1x1x8x8xf32>
    tpu.vector_store %arg19[%c0_50, %c3, %c0_51, %c0_52], %100 {strides = array<i32>} : memref<1x4x8x8xf32, #tpu.memory_space<vmem>>, vector<1x1x8x8xf32>,
    %cst_53 = arith.constant dense<0.000000e+00> : vector<8x8xf32>
    %101 = tpu.matmul %97, %85, %cst_53 {dimension_numbers = #tpu.dot_dimension_numbers<[1], [0], [0], [1], [0, 0, 1, 1], [], []>} : vector<8x8xf32>, vector<8x8xf32>, vector<8x8xf32> -> vector<8x8xf32>
    %102 = vector.extract_strided_slice %17 {offsets = [24, 0], sizes = [8, 32], strides = [1, 1]} : vector<32x32xf32> to vector<8x32xf32>
    %cst_54 = arith.constant dense<0.000000e+00> : vector<8x32xf32>
    %103 = tpu.matmul %101, %102, %cst_54 {dimension_numbers = #tpu.dot_dimension_numbers<[1], [0], [0], [1], [0, 0, 1, 1], [], []>} : vector<8x8xf32>, vector<8x32xf32>, vector<8x32xf32> -> vector<8x32xf32>
    %104 = arith.addf %82, %103 : vector<8x32xf32>
    %c0_55 = arith.constant 0 : index
    %c0_56 = arith.constant 0 : index
    %105 = vector.load %arg9[%c0_55, %c0_56] : memref<1x32xf32, #tpu.memory_space<vmem>>, vector<1x32xf32>
    %106 = vector.broadcast %105 : vector<1x32xf32> to vector<8x32xf32>
    %107 = arith.addf %104, %106 : vector<8x32xf32>
    %108 = arith.addf %1, %107 : vector<8x32xf32>
    %c0_57 = arith.constant 0 : index
    %c0_58 = arith.constant 0 : index
    %109 = vector.load %arg10[%c0_57, %c0_58] : memref<1x32xf32, #tpu.memory_space<vmem>>, vector<1x32xf32>
    %c0_59 = arith.constant 0 : index
    %c0_60 = arith.constant 0 : index
    %110 = vector.load %arg11[%c0_59, %c0_60] : memref<1x32xf32, #tpu.memory_space<vmem>>, vector<1x32xf32>
    %cst_61 = arith.constant dense<0.000000e+00> : vector<8xf32>
    %111 = vector.multi_reduction <add>, %108, %cst_61 [1] : vector<8x32xf32> to vector<8xf32>
    %112 = vector.shape_cast %111 : vector<8xf32> to vector<8x1xf32>
    %cst_62 = arith.constant 3.200000e+01 : f32
    %113 = vector.broadcast %cst_62 : f32 to vector<8x1xf32>
    %114 = arith.divf %112, %113 : vector<8x1xf32>
    %115 = vector.broadcast %114 : vector<8x1xf32> to vector<8x32xf32>
    %116 = arith.subf %108, %115 : vector<8x32xf32>
    %117 = arith.mulf %116, %116 : vector<8x32xf32>
    %cst_63 = arith.constant dense<0.000000e+00> : vector<8xf32>
    %118 = vector.multi_reduction <add>, %117, %cst_63 [1] : vector<8x32xf32> to vector<8xf32>
    %119 = vector.shape_cast %118 : vector<8xf32> to vector<8x1xf32>
    %cst_64 = arith.constant 3.200000e+01 : f32
    %120 = vector.broadcast %cst_64 : f32 to vector<8x1xf32>
    %121 = arith.divf %119, %120 : vector<8x1xf32>
    %122 = vector.broadcast %114 : vector<8x1xf32> to vector<8x32xf32>
    %123 = arith.subf %108, %122 : vector<8x32xf32>
    %cst_65 = arith.constant 9.99999974E-6 : f32
    %124 = vector.broadcast %cst_65 : f32 to vector<8x1xf32>
    %125 = arith.addf %121, %124 : vector<8x1xf32>
    %126 = math.rsqrt %125 : vector<8x1xf32>
    %127 = vector.broadcast %126 : vector<8x1xf32> to vector<8x32xf32>
    %128 = arith.mulf %123, %127 : vector<8x32xf32>
    %129 = vector.broadcast %109 : vector<1x32xf32> to vector<8x32xf32>
    %130 = arith.mulf %128, %129 : vector<8x32xf32>
    %131 = vector.broadcast %110 : vector<1x32xf32> to vector<8x32xf32>
    %132 = arith.addf %130, %131 : vector<8x32xf32>
    %c0_66 = arith.constant 0 : index
    %c0_67 = arith.constant 0 : index
    %133 = vector.load %arg12[%c0_66, %c0_67] : memref<32x64xf32, #tpu.memory_space<vmem>>, vector<32x64xf32>
    %cst_68 = arith.constant dense<0.000000e+00> : vector<8x64xf32>
    %134 = tpu.matmul %132, %133, %cst_68 {dimension_numbers = #tpu.dot_dimension_numbers<[1], [0], [0], [1], [0, 0, 1, 1], [], []>} : vector<8x32xf32>, vector<32x64xf32>, vector<8x64xf32> -> vector<8x64xf32>
    %c0_69 = arith.constant 0 : index
    %c0_70 = arith.constant 0 : index
    %135 = vector.load %arg13[%c0_69, %c0_70] : memref<1x64xf32, #tpu.memory_space<vmem>>, vector<1x64xf32>
    %136 = vector.broadcast %135 : vector<1x64xf32> to vector<8x64xf32>
    %137 = arith.addf %134, %136 : vector<8x64xf32>
    %cst_71 = arith.constant 0.000000e+00 : f32
    %138 = vector.broadcast %cst_71 : f32 to vector<8x64xf32>
    %139 = arith.maximumf %137, %138 : vector<8x64xf32>
    %c0_72 = arith.constant 0 : index
    %c0_73 = arith.constant 0 : index
    %140 = vector.load %arg14[%c0_72, %c0_73] : memref<64x32xf32, #tpu.memory_space<vmem>>, vector<64x32xf32>
    %cst_74 = arith.constant dense<0.000000e+00> : vector<8x32xf32>
    %141 = tpu.matmul %139, %140, %cst_74 {dimension_numbers = #tpu.dot_dimension_numbers<[1], [0], [0], [1], [0, 0, 1, 1], [], []>} : vector<8x64xf32>, vector<64x32xf32>, vector<8x32xf32> -> vector<8x32xf32>
    %c0_75 = arith.constant 0 : index
    %c0_76 = arith.constant 0 : index
    %142 = vector.load %arg15[%c0_75, %c0_76] : memref<1x32xf32, #tpu.memory_space<vmem>>, vector<1x32xf32>
    %143 = vector.broadcast %142 : vector<1x32xf32> to vector<8x32xf32>
    %144 = arith.addf %141, %143 : vector<8x32xf32>
    %145 = arith.addf %132, %144 : vector<8x32xf32>
    %c0_77 = arith.constant 0 : index
    %c0_78 = arith.constant 0 : index
    %146 = vector.load %arg16[%c0_77, %c0_78] : memref<1x32xf32, #tpu.memory_space<vmem>>, vector<1x32xf32>
    %c0_79 = arith.constant 0 : index
    %c0_80 = arith.constant 0 : index
    %147 = vector.load %arg17[%c0_79, %c0_80] : memref<1x32xf32, #tpu.memory_space<vmem>>, vector<1x32xf32>
    %cst_81 = arith.constant dense<0.000000e+00> : vector<8xf32>
    %148 = vector.multi_reduction <add>, %145, %cst_81 [1] : vector<8x32xf32> to vector<8xf32>
    %149 = vector.shape_cast %148 : vector<8xf32> to vector<8x1xf32>
    %cst_82 = arith.constant 3.200000e+01 : f32
    %150 = vector.broadcast %cst_82 : f32 to vector<8x1xf32>
    %151 = arith.divf %149, %150 : vector<8x1xf32>
    %152 = vector.broadcast %151 : vector<8x1xf32> to vector<8x32xf32>
    %153 = arith.subf %145, %152 : vector<8x32xf32>
    %154 = arith.mulf %153, %153 : vector<8x32xf32>
    %cst_83 = arith.constant dense<0.000000e+00> : vector<8xf32>
    %155 = vector.multi_reduction <add>, %154, %cst_83 [1] : vector<8x32xf32> to vector<8xf32>
    %156 = vector.shape_cast %155 : vector<8xf32> to vector<8x1xf32>
    %cst_84 = arith.constant 3.200000e+01 : f32
    %157 = vector.broadcast %cst_84 : f32 to vector<8x1xf32>
    %158 = arith.divf %156, %157 : vector<8x1xf32>
    %159 = vector.broadcast %151 : vector<8x1xf32> to vector<8x32xf32>
    %160 = arith.subf %145, %159 : vector<8x32xf32>
    %cst_85 = arith.constant 9.99999974E-6 : f32
    %161 = vector.broadcast %cst_85 : f32 to vector<8x1xf32>
    %162 = arith.addf %158, %161 : vector<8x1xf32>
    %163 = math.rsqrt %162 : vector<8x1xf32>
    %164 = vector.broadcast %163 : vector<8x1xf32> to vector<8x32xf32>
    %165 = arith.mulf %160, %164 : vector<8x32xf32>
    %166 = vector.broadcast %146 : vector<1x32xf32> to vector<8x32xf32>
    %167 = arith.mulf %165, %166 : vector<8x32xf32>
    %168 = vector.broadcast %147 : vector<1x32xf32> to vector<8x32xf32>
    %169 = arith.addf %167, %168 : vector<8x32xf32>
    %c0_86 = arith.constant 0 : index
    %c0_87 = arith.constant 0 : index
    %c0_88 = arith.constant 0 : index
    %170 = vector.load %arg18[%c0_86, %c0_87, %c0_88] : memref<1x8x32xf32, #tpu.memory_space<vmem>>, vector<1x8x32xf32>
    %171 = vector.shape_cast %170 : vector<1x8x32xf32> to vector<8x32xf32>
    %172 = vector.shape_cast %169 : vector<8x32xf32> to vector<1x8x32xf32>
    tpu.vector_store %arg18[%c0_86, %c0_87, %c0_88], %172 {strides = array<i32>} : memref<1x8x32xf32, #tpu.memory_space<vmem>>, vector<1x8x32xf32>,
    return
  }
  func.func @transform_0(%arg0: i32) -> (i32, i32, i32) {
    %c0_i32 = arith.constant 0 : i32
    %c0_i32_0 = arith.constant 0 : i32
    %c0_i32_1 = arith.constant 0 : i32
    return %arg0, %c0_i32, %c0_i32_0 : i32, i32, i32
  }
  func.func @transform_1(%arg0: i32) -> (i32, i32) {
    %c0_i32 = arith.constant 0 : i32
    %c0_i32_0 = arith.constant 0 : i32
    %c0_i32_1 = arith.constant 0 : i32
    return %c0_i32, %c0_i32_0 : i32, i32
  }
  func.func @transform_2(%arg0: i32) -> (i32, i32) {
    %c0_i32 = arith.constant 0 : i32
    %c0_i32_0 = arith.constant 0 : i32
    %c0_i32_1 = arith.constant 0 : i32
    return %c0_i32, %c0_i32_0 : i32, i32
  }
  func.func @transform_3(%arg0: i32) -> (i32, i32) {
    %c0_i32 = arith.constant 0 : i32
    %c0_i32_0 = arith.constant 0 : i32
    %c0_i32_1 = arith.constant 0 : i32
    return %c0_i32, %c0_i32_0 : i32, i32
  }
  func.func @transform_4(%arg0: i32) -> (i32, i32) {
    %c0_i32 = arith.constant 0 : i32
    %c0_i32_0 = arith.constant 0 : i32
    %c0_i32_1 = arith.constant 0 : i32
    return %c0_i32, %c0_i32_0 : i32, i32
  }
  func.func @transform_5(%arg0: i32) -> (i32, i32) {
    %c0_i32 = arith.constant 0 : i32
    %c0_i32_0 = arith.constant 0 : i32
    %c0_i32_1 = arith.constant 0 : i32
    return %c0_i32, %c0_i32_0 : i32, i32
  }
  func.func @transform_6(%arg0: i32) -> (i32, i32) {
    %c0_i32 = arith.constant 0 : i32
    %c0_i32_0 = arith.constant 0 : i32
    %c0_i32_1 = arith.constant 0 : i32
    return %c0_i32, %c0_i32_0 : i32, i32
  }
  func.func @transform_7(%arg0: i32) -> (i32, i32) {
    %c0_i32 = arith.constant 0 : i32
    %c0_i32_0 = arith.constant 0 : i32
    %c0_i32_1 = arith.constant 0 : i32
    return %c0_i32, %c0_i32_0 : i32, i32
  }
  func.func @transform_8(%arg0: i32) -> (i32, i32) {
    %c0_i32 = arith.constant 0 : i32
    %c0_i32_0 = arith.constant 0 : i32
    %c0_i32_1 = arith.constant 0 : i32
    return %c0_i32, %c0_i32_0 : i32, i32
  }
  func.func @transform_9(%arg0: i32) -> (i32, i32) {
    %c0_i32 = arith.constant 0 : i32
    %c0_i32_0 = arith.constant 0 : i32
    %c0_i32_1 = arith.constant 0 : i32
    return %c0_i32, %c0_i32_0 : i32, i32
  }
  func.func @transform_10(%arg0: i32) -> (i32, i32) {
    %c0_i32 = arith.constant 0 : i32
    %c0_i32_0 = arith.constant 0 : i32
    %c0_i32_1 = arith.constant 0 : i32
    return %c0_i32, %c0_i32_0 : i32, i32
  }
  func.func @transform_11(%arg0: i32) -> (i32, i32) {
    %c0_i32 = arith.constant 0 : i32
    %c0_i32_0 = arith.constant 0 : i32
    %c0_i32_1 = arith.constant 0 : i32
    return %c0_i32, %c0_i32_0 : i32, i32
  }
  func.func @transform_12(%arg0: i32) -> (i32, i32) {
    %c0_i32 = arith.constant 0 : i32
    %c0_i32_0 = arith.constant 0 : i32
    %c0_i32_1 = arith.constant 0 : i32
    return %c0_i32, %c0_i32_0 : i32, i32
  }
  func.func @transform_13(%arg0: i32) -> (i32, i32) {
    %c0_i32 = arith.constant 0 : i32
    %c0_i32_0 = arith.constant 0 : i32
    %c0_i32_1 = arith.constant 0 : i32
    return %c0_i32, %c0_i32_0 : i32, i32
  }
  func.func @transform_14(%arg0: i32) -> (i32, i32) {
    %c0_i32 = arith.constant 0 : i32
    %c0_i32_0 = arith.constant 0 : i32
    %c0_i32_1 = arith.constant 0 : i32
    return %c0_i32, %c0_i32_0 : i32, i32
  }
  func.func @transform_15(%arg0: i32) -> (i32, i32) {
    %c0_i32 = arith.constant 0 : i32
    %c0_i32_0 = arith.constant 0 : i32
    %c0_i32_1 = arith.constant 0 : i32
    return %c0_i32, %c0_i32_0 : i32, i32
  }
  func.func @transform_16(%arg0: i32) -> (i32, i32) {
    %c0_i32 = arith.constant 0 : i32
    %c0_i32_0 = arith.constant 0 : i32
    %c0_i32_1 = arith.constant 0 : i32
    return %c0_i32, %c0_i32_0 : i32, i32
  }
  func.func @transform_17(%arg0: i32) -> (i32, i32, i32) {
    %c0_i32 = arith.constant 0 : i32
    %c0_i32_0 = arith.constant 0 : i32
    %c0_i32_1 = arith.constant 0 : i32
    return %arg0, %c0_i32, %c0_i32_0 : i32, i32, i32
  }
  func.func @transform_18(%arg0: i32) -> (i32, i32, i32, i32) {
    %c0_i32 = arith.constant 0 : i32
    %c0_i32_0 = arith.constant 0 : i32
    %c0_i32_1 = arith.constant 0 : i32
    %c0_i32_2 = arith.constant 0 : i32
    return %arg0, %c0_i32, %c0_i32_0, %c0_i32_1 : i32, i32, i32, i32
  }
}

</mosaic_0001>

<llo_original>
// kernel: tpu_custom_call.1
$region0: #{tpu_custom_call.1}
  #allocation0 [shape = 'u32[]', space=smem, size = 0x4, offset = 0x4, fixed_abs, tag = 'smem constant byte address 0x4 - core index']
  #allocation1 [shape = 'u32[144,128]{1,0:T(1,128)}', space=vmem, size = 0x12000, scoped, tag = 'internal scratch']
  %s0 = inlined_call_operand.hbm [shape: f32[2,8,32], index: 0, kind: input, shape index: {}]
  %s1 = inlined_call_operand.vmem [shape: f32[32,32], index: 1, kind: input, shape index: {}]
  %s2 = inlined_call_operand.vmem [shape: f32[1,32], index: 2, kind: input, shape index: {}]
  %s3 = inlined_call_operand.vmem [shape: f32[32,32], index: 3, kind: input, shape index: {}]
  %s4 = inlined_call_operand.vmem [shape: f32[1,32], index: 4, kind: input, shape index: {}]
  %s5 = inlined_call_operand.vmem [shape: f32[32,32], index: 5, kind: input, shape index: {}]
  %s6 = inlined_call_operand.vmem [shape: f32[1,32], index: 6, kind: input, shape index: {}]
  %s7 = inlined_call_operand.hbm [shape: f32[32,32], index: 7, kind: input, shape index: {}]
  %s8 = inlined_call_operand.vmem [shape: f32[1,32], index: 8, kind: input, shape index: {}]
  %s9 = inlined_call_operand.vmem [shape: f32[1,32], index: 9, kind: input, shape index: {}]
  %s10 = inlined_call_operand.vmem [shape: f32[1,32], index: 10, kind: input, shape index: {}]
  %s11 = inlined_call_operand.hbm [shape: f32[32,64], index: 11, kind: input, shape index: {}]
  %s12 = inlined_call_operand.vmem [shape: f32[1,64], index: 12, kind: input, shape index: {}]
  %s13 = inlined_call_operand.vmem [shape: f32[64,32], index: 13, kind: input, shape index: {}]
  %s14 = inlined_call_operand.vmem [shape: f32[1,32], index: 14, kind: input, shape index: {}]
  %s15 = inlined_call_operand.vmem [shape: f32[1,32], index: 15, kind: input, shape index: {}]
  %s16 = inlined_call_operand.vmem [shape: f32[1,32], index: 16, kind: input, shape index: {}]
  %s17 = inlined_call_operand.hbm [shape: f32[2,8,32], index: 17, kind: output, shape index: {0}]
  %s18 = inlined_call_operand.hbm [shape: f32[2,4,8,8], index: 18, kind: output, shape index: {1}]
  %19 = xla_tuple %s17, %s18
  %s20 = sld [smem:[#allocation0]]
  $region121: #{tpu_custom_call.1} parent=0
    _
  %s22 = ssub.s32 1, %s20
  %s23 = scalar_select 0, %s22, %s20
  $region1: #{tpu_custom_call.1} parent=0
    #allocation2 [shape = 'u8[8192]{0}', space=vmem, size = 0x2000, scoped, tag = 'input window, operand 0']
    #allocation3 [shape = 's32[2]{0}', space=sflag, size = 0x8, scoped, tag = 'scoped memory for tpu_custom_call.1']
    #allocation4 [shape = 's32[2]{0}', space=sflag, size = 0x8, scoped, tag = 'scoped memory for tpu_custom_call.1']
    #allocation5 [shape = 'u8[16384]{0}', space=vmem, size = 0x4000, scoped, tag = 'input window, operand 7, single buffered']
    #allocation6 [shape = 's32[1]{0}', space=sflag, size = 0x4, scoped, tag = 'scoped memory for tpu_custom_call.1']
    #allocation7 [shape = 'u8[16384]{0}', space=vmem, size = 0x4000, scoped, tag = 'input window, operand 11, single buffered']
    #allocation8 [shape = 'u8[8192]{0}', space=vmem, size = 0x2000, scoped, tag = 'output window, operand 0']
    #allocation9 [shape = 'u8[32768]{0}', space=vmem, size = 0x8000, scoped, tag = 'output window, operand 1']
    #allocation10 [shape = 's32[2]{0}', space=sflag, size = 0x8, scoped, tag = 'scoped memory for tpu_custom_call.1']
    %24 = vsyncpa [#allocation3], 0
    %s25 = scalar_lea.sflag [#allocation3], 1
    %26 = vsyncpa %s25, 0
    %27 = vsyncpa [#allocation6], 0
    %28 = vsyncpa [#allocation4], 0
    %s29 = scalar_lea.sflag [#allocation4], 1
    %30 = vsyncpa %s29, 0
    %31 = vsyncpa [#allocation10], 0
    %s32 = scalar_lea.sflag [#allocation10], 1
    %33 = vsyncpa %s32, 0
    loop: start=0, step=1, limit=4
    $region2: #{tpu_custom_call.1} parent=1 // loop_pre_header
      _
    $region3: #{tpu_custom_call.1} parent=1 // loop_header
      %s35 = sphi 0, %s39
      %p36 = scmp.ge.s32.totalorder %s35, 4
      %s45 = sphi 0, %s47
      %s48 = sphi 0, %s45
      %s49 = sphi 0, %s48
      %s65 = sphi 0, %s49
      %s69 = sphi 0, %s69
      %s71 = sphi 0, %s69
      %s72 = sphi 0, %s71
      %s86 = sphi 0, %s72
      %s90 = sphi 0, %s90
      %s92 = sphi 0, %s90
      %s93 = sphi 0, %s92
      %s107 = sphi 0, %s93
      %s111 = sphi 0, %s111
      %s113 = sphi 0, %s111
      %s114 = sphi 0, %s113
      %s128 = sphi 0, %s114
      %s132 = sphi 0, %s132
      %s134 = sphi 0, %s132
      %s135 = sphi 0, %s134
      %s149 = sphi 0, %s135
      %s153 = sphi 0, %s153
      %s155 = sphi 0, %s153
      %s156 = sphi 0, %s155
      %s170 = sphi 0, %s156
      %s174 = sphi 0, %s174
      %s176 = sphi 0, %s174
      %s177 = sphi 0, %s176
      %s191 = sphi 0, %s177
      %s195 = sphi 0, %s195
      %s197 = sphi 0, %s195
      %s198 = sphi 0, %s197
      %s212 = sphi 0, %s198
      %s216 = sphi 0, %s216
      %s218 = sphi 0, %s216
      %s219 = sphi 0, %s218
      %s233 = sphi 0, %s219
      %s237 = sphi 0, %s237
      %s239 = sphi 0, %s237
      %s240 = sphi 0, %s239
      %s254 = sphi 0, %s240
      %s258 = sphi 0, %s258
      %s260 = sphi 0, %s258
      %s261 = sphi 0, %s260
      %s275 = sphi 0, %s261
      %s279 = sphi 0, %s279
      %s281 = sphi 0, %s279
      %s282 = sphi 0, %s281
      %s296 = sphi 0, %s282
      %s300 = sphi 0, %s300
      %s302 = sphi 0, %s300
      %s303 = sphi 0, %s302
      %s317 = sphi 0, %s303
      %s321 = sphi 0, %s321
      %s323 = sphi 0, %s321
      %s324 = sphi 0, %s323
      %s338 = sphi 0, %s324
      %s342 = sphi 0, %s342
      %s344 = sphi 0, %s342
      %s345 = sphi 0, %s344
      %s359 = sphi 0, %s345
      %s363 = sphi 0, %s363
      %s365 = sphi 0, %s363
      %s366 = sphi 0, %s365
      %s380 = sphi 0, %s366
      %s384 = sphi 0, %s384
      %s386 = sphi 0, %s384
      %s387 = sphi 0, %s386
      %s401 = sphi 0, %s387
      %s407 = sphi 0, %s409
      %s410 = sphi 0, %s407
      %s411 = sphi 0, %s410
      %s427 = sphi 0, %s411
      %s433 = sphi 0, %s435
      %s436 = sphi 0, %s433
      %s437 = sphi 0, %s436
      %s453 = sphi 0, %s437
    $region4: #{tpu_custom_call.1} parent=1 // loop_header_branch
      %38 = sbr.rel (%p36) target = $region8
    $region5: #{tpu_custom_call.1} parent=1 // loop_body
      %s40 = ssub.s32 %s35, 1
      %s41 = ssub.s32 %s35, 2
      %s42 = sadd.s32 %s35, 1
      %s43 = ssub.s32 %s35, %s42
      %p44 = scmp.eq.s32.totalorder %s43, 0
      %s46 = sadd.s32 %s45, 1
      %s47 = scalar_select %p44, %s45, %s46
      %p50 = pneg %p44
      %p51 = scmp.eq.s32.totalorder %s35, 1
      %p52 = por %p50, %p51
      %p53 = scmp.ne.s32.totalorder %s45, %s48
      %p54 = scmp.eq.s32.totalorder %s35, 0
      %p55 = por %p53, %p54
      %p56 = scmp.ne.s32.totalorder %s45, %s48
      %p57 = scmp.eq.s32.totalorder %s40, 1
      %p58 = por %p56, %p57
      %p59 = scmp.ne.s32.totalorder %s48, %s49
      %p60 = scmp.eq.s32.totalorder %s40, 0
      %p61 = por %p59, %p60
      %p62 = scmp.ne.s32.totalorder %s48, %s49
      %p63 = scmp.eq.s32.totalorder %s41, 1
      %p64 = por %p62, %p63
      %p66 = scmp.ne.s32.totalorder %s49, %s65
      %p67 = scmp.eq.s32.totalorder %s41, 0
      %p68 = por %p66, %p67
      %s70 = sadd.s32 %s69, 1
      %p73 = scmp.eq.s32.totalorder %s35, 1
      %p74 = scmp.ne.s32.totalorder %s69, %s71
      %p75 = scmp.eq.s32.totalorder %s35, 0
      %p76 = por %p74, %p75
      %p77 = scmp.ne.s32.totalorder %s69, %s71
      %p78 = scmp.eq.s32.totalorder %s40, 1
      %p79 = por %p77, %p78
      %p80 = scmp.ne.s32.totalorder %s71, %s72
      %p81 = scmp.eq.s32.totalorder %s40, 0
      %p82 = por %p80, %p81
      %p83 = scmp.ne.s32.totalorder %s71, %s72
      %p84 = scmp.eq.s32.totalorder %s41, 1
      %p85 = por %p83, %p84
      %p87 = scmp.ne.s32.totalorder %s72, %s86
      %p88 = scmp.eq.s32.totalorder %s41, 0
      %p89 = por %p87, %p88
      %s91 = sadd.s32 %s90, 1
      %p94 = scmp.eq.s32.totalorder %s35, 1
      %p95 = scmp.ne.s32.totalorder %s90, %s92
      %p96 = scmp.eq.s32.totalorder %s35, 0
      %p97 = por %p95, %p96
      %p98 = scmp.ne.s32.totalorder %s90, %s92
      %p99 = scmp.eq.s32.totalorder %s40, 1
      %p100 = por %p98, %p99
      %p101 = scmp.ne.s32.totalorder %s92, %s93
      %p102 = scmp.eq.s32.totalorder %s40, 0
      %p103 = por %p101, %p102
      %p104 = scmp.ne.s32.totalorder %s92, %s93
      %p105 = scmp.eq.s32.totalorder %s41, 1
      %p106 = por %p104, %p105
      %p108 = scmp.ne.s32.totalorder %s93, %s107
      %p109 = scmp.eq.s32.totalorder %s41, 0
      %p110 = por %p108, %p109
      %s112 = sadd.s32 %s111, 1
      %p115 = scmp.eq.s32.totalorder %s35, 1
      %p116 = scmp.ne.s32.totalorder %s111, %s113
      %p117 = scmp.eq.s32.totalorder %s35, 0
      %p118 = por %p116, %p117
      %p119 = scmp.ne.s32.totalorder %s111, %s113
      %p120 = scmp.eq.s32.totalorder %s40, 1
      %p121 = por %p119, %p120
      %p122 = scmp.ne.s32.totalorder %s113, %s114
      %p123 = scmp.eq.s32.totalorder %s40, 0
      %p124 = por %p122, %p123
      %p125 = scmp.ne.s32.totalorder %s113, %s114
      %p126 = scmp.eq.s32.totalorder %s41, 1
      %p127 = por %p125, %p126
      %p129 = scmp.ne.s32.totalorder %s114, %s128
      %p130 = scmp.eq.s32.totalorder %s41, 0
      %p131 = por %p129, %p130
      %s133 = sadd.s32 %s132, 1
      %p136 = scmp.eq.s32.totalorder %s35, 1
      %p137 = scmp.ne.s32.totalorder %s132, %s134
      %p138 = scmp.eq.s32.totalorder %s35, 0
      %p139 = por %p137, %p138
      %p140 = scmp.ne.s32.totalorder %s132, %s134
      %p141 = scmp.eq.s32.totalorder %s40, 1
      %p142 = por %p140, %p141
      %p143 = scmp.ne.s32.totalorder %s134, %s135
      %p144 = scmp.eq.s32.totalorder %s40, 0
      %p145 = por %p143, %p144
      %p146 = scmp.ne.s32.totalorder %s134, %s135
      %p147 = scmp.eq.s32.totalorder %s41, 1
      %p148 = por %p146, %p147
      %p150 = scmp.ne.s32.totalorder %s135, %s149
      %p151 = scmp.eq.s32.totalorder %s41, 0
      %p152 = por %p150, %p151
      %s154 = sadd.s32 %s153, 1
      %p157 = scmp.eq.s32.totalorder %s35, 1
      %p158 = scmp.ne.s32.totalorder %s153, %s155
      %p159 = scmp.eq.s32.totalorder %s35, 0
      %p160 = por %p158, %p159
      %p161 = scmp.ne.s32.totalorder %s153, %s155
      %p162 = scmp.eq.s32.totalorder %s40, 1
      %p163 = por %p161, %p162
      %p164 = scmp.ne.s32.totalorder %s155, %s156
      %p165 = scmp.eq.s32.totalorder %s40, 0
      %p166 = por %p164, %p165
      %p167 = scmp.ne.s32.totalorder %s155, %s156
      %p168 = scmp.eq.s32.totalorder %s41, 1
      %p169 = por %p167, %p168
      %p171 = scmp.ne.s32.totalorder %s156, %s170
      %p172 = scmp.eq.s32.totalorder %s41, 0
      %p173 = por %p171, %p172
      %s175 = sadd.s32 %s174, 1
      %p178 = scmp.eq.s32.totalorder %s35, 1
      %p179 = scmp.ne.s32.totalorder %s174, %s176
      %p180 = scmp.eq.s32.totalorder %s35, 0
      %p181 = por %p179, %p180
      %p182 = scmp.ne.s32.totalorder %s174, %s176
      %p183 = scmp.eq.s32.totalorder %s40, 1
      %p184 = por %p182, %p183
      %p185 = scmp.ne.s32.totalorder %s176, %s177
      %p186 = scmp.eq.s32.totalorder %s40, 0
      %p187 = por %p185, %p186
      %p188 = scmp.ne.s32.totalorder %s176, %s177
      %p189 = scmp.eq.s32.totalorder %s41, 1
      %p190 = por %p188, %p189
      %p192 = scmp.ne.s32.totalorder %s177, %s191
      %p193 = scmp.eq.s32.totalorder %s41, 0
      %p194 = por %p192, %p193
      %s196 = sadd.s32 %s195, 1
      %p199 = scmp.eq.s32.totalorder %s35, 1
      %p200 = scmp.ne.s32.totalorder %s195, %s197
      %p201 = scmp.eq.s32.totalorder %s35, 0
      %p202 = por %p200, %p201
      %p203 = scmp.ne.s32.totalorder %s195, %s197
      %p204 = scmp.eq.s32.totalorder %s40, 1
      %p205 = por %p203, %p204
      %p206 = scmp.ne.s32.totalorder %s197, %s198
      %p207 = scmp.eq.s32.totalorder %s40, 0
      %p208 = por %p206, %p207
      %p209 = scmp.ne.s32.totalorder %s197, %s198
      %p210 = scmp.eq.s32.totalorder %s41, 1
      %p211 = por %p209, %p210
      %p213 = scmp.ne.s32.totalorder %s198, %s212
      %p214 = scmp.eq.s32.totalorder %s41, 0
      %p215 = por %p213, %p214
      %s217 = sadd.s32 %s216, 1
      %p220 = scmp.eq.s32.totalorder %s35, 1
      %p221 = scmp.ne.s32.totalorder %s216, %s218
      %p222 = scmp.eq.s32.totalorder %s35, 0
      %p223 = por %p221, %p222
      %p224 = scmp.ne.s32.totalorder %s216, %s218
      %p225 = scmp.eq.s32.totalorder %s40, 1
      %p226 = por %p224, %p225
      %p227 = scmp.ne.s32.totalorder %s218, %s219
      %p228 = scmp.eq.s32.totalorder %s40, 0
      %p229 = por %p227, %p228
      %p230 = scmp.ne.s32.totalorder %s218, %s219
      %p231 = scmp.eq.s32.totalorder %s41, 1
      %p232 = por %p230, %p231
      %p234 = scmp.ne.s32.totalorder %s219, %s233
      %p235 = scmp.eq.s32.totalorder %s41, 0
      %p236 = por %p234, %p235
      %s238 = sadd.s32 %s237, 1
      %p241 = scmp.eq.s32.totalorder %s35, 1
      %p242 = scmp.ne.s32.totalorder %s237, %s239
      %p243 = scmp.eq.s32.totalorder %s35, 0
      %p244 = por %p242, %p243
      %p245 = scmp.ne.s32.totalorder %s237, %s239
      %p246 = scmp.eq.s32.totalorder %s40, 1
      %p247 = por %p245, %p246
      %p248 = scmp.ne.s32.totalorder %s239, %s240
      %p249 = scmp.eq.s32.totalorder %s40, 0
      %p250 = por %p248, %p249
      %p251 = scmp.ne.s32.totalorder %s239, %s240
      %p252 = scmp.eq.s32.totalorder %s41, 1
      %p253 = por %p251, %p252
      %p255 = scmp.ne.s32.totalorder %s240, %s254
      %p256 = scmp.eq.s32.totalorder %s41, 0
      %p257 = por %p255, %p256
      %s259 = sadd.s32 %s258, 1
      %p262 = scmp.eq.s32.totalorder %s35, 1
      %p263 = scmp.ne.s32.totalorder %s258, %s260
      %p264 = scmp.eq.s32.totalorder %s35, 0
      %p265 = por %p263, %p264
      %p266 = scmp.ne.s32.totalorder %s258, %s260
      %p267 = scmp.eq.s32.totalorder %s40, 1
      %p268 = por %p266, %p267
      %p269 = scmp.ne.s32.totalorder %s260, %s261
      %p270 = scmp.eq.s32.totalorder %s40, 0
      %p271 = por %p269, %p270
      %p272 = scmp.ne.s32.totalorder %s260, %s261
      %p273 = scmp.eq.s32.totalorder %s41, 1
      %p274 = por %p272, %p273
      %p276 = scmp.ne.s32.totalorder %s261, %s275
      %p277 = scmp.eq.s32.totalorder %s41, 0
      %p278 = por %p276, %p277
      %s280 = sadd.s32 %s279, 1
      %p283 = scmp.eq.s32.totalorder %s35, 1
      %p284 = scmp.ne.s32.totalorder %s279, %s281
      %p285 = scmp.eq.s32.totalorder %s35, 0
      %p286 = por %p284, %p285
      %p287 = scmp.ne.s32.totalorder %s279, %s281
      %p288 = scmp.eq.s32.totalorder %s40, 1
      %p289 = por %p287, %p288
      %p290 = scmp.ne.s32.totalorder %s281, %s282
      %p291 = scmp.eq.s32.totalorder %s40, 0
      %p292 = por %p290, %p291
      %p293 = scmp.ne.s32.totalorder %s281, %s282
      %p294 = scmp.eq.s32.totalorder %s41, 1
      %p295 = por %p293, %p294
      %p297 = scmp.ne.s32.totalorder %s282, %s296
      %p298 = scmp.eq.s32.totalorder %s41, 0
      %p299 = por %p297, %p298
      %s301 = sadd.s32 %s300, 1
      %p304 = scmp.eq.s32.totalorder %s35, 1
      %p305 = scmp.ne.s32.totalorder %s300, %s302
      %p306 = scmp.eq.s32.totalorder %s35, 0
      %p307 = por %p305, %p306
      %p308 = scmp.ne.s32.totalorder %s300, %s302
      %p309 = scmp.eq.s32.totalorder %s40, 1
      %p310 = por %p308, %p309
      %p311 = scmp.ne.s32.totalorder %s302, %s303
      %p312 = scmp.eq.s32.totalorder %s40, 0
      %p313 = por %p311, %p312
      %p314 = scmp.ne.s32.totalorder %s302, %s303
      %p315 = scmp.eq.s32.totalorder %s41, 1
      %p316 = por %p314, %p315
      %p318 = scmp.ne.s32.totalorder %s303, %s317
      %p319 = scmp.eq.s32.totalorder %s41, 0
      %p320 = por %p318, %p319
      %s322 = sadd.s32 %s321, 1
      %p325 = scmp.eq.s32.totalorder %s35, 1
      %p326 = scmp.ne.s32.totalorder %s321, %s323
      %p327 = scmp.eq.s32.totalorder %s35, 0
      %p328 = por %p326, %p327
      %p329 = scmp.ne.s32.totalorder %s321, %s323
      %p330 = scmp.eq.s32.totalorder %s40, 1
      %p331 = por %p329, %p330
      %p332 = scmp.ne.s32.totalorder %s323, %s324
      %p333 = scmp.eq.s32.totalorder %s40, 0
      %p334 = por %p332, %p333
      %p335 = scmp.ne.s32.totalorder %s323, %s324
      %p336 = scmp.eq.s32.totalorder %s41, 1
      %p337 = por %p335, %p336
      %p339 = scmp.ne.s32.totalorder %s324, %s338
      %p340 = scmp.eq.s32.totalorder %s41, 0
      %p341 = por %p339, %p340
      %s343 = sadd.s32 %s342, 1
      %p346 = scmp.eq.s32.totalorder %s35, 1
      %p347 = scmp.ne.s32.totalorder %s342, %s344
      %p348 = scmp.eq.s32.totalorder %s35, 0
      %p349 = por %p347, %p348
      %p350 = scmp.ne.s32.totalorder %s342, %s344
      %p351 = scmp.eq.s32.totalorder %s40, 1
      %p352 = por %p350, %p351
      %p353 = scmp.ne.s32.totalorder %s344, %s345
      %p354 = scmp.eq.s32.totalorder %s40, 0
      %p355 = por %p353, %p354
      %p356 = scmp.ne.s32.totalorder %s344, %s345
      %p357 = scmp.eq.s32.totalorder %s41, 1
      %p358 = por %p356, %p357
      %p360 = scmp.ne.s32.totalorder %s345, %s359
      %p361 = scmp.eq.s32.totalorder %s41, 0
      %p362 = por %p360, %p361
      %s364 = sadd.s32 %s363, 1
      %p367 = scmp.eq.s32.totalorder %s35, 1
      %p368 = scmp.ne.s32.totalorder %s363, %s365
      %p369 = scmp.eq.s32.totalorder %s35, 0
      %p370 = por %p368, %p369
      %p371 = scmp.ne.s32.totalorder %s363, %s365
      %p372 = scmp.eq.s32.totalorder %s40, 1
      %p373 = por %p371, %p372
      %p374 = scmp.ne.s32.totalorder %s365, %s366
      %p375 = scmp.eq.s32.totalorder %s40, 0
      %p376 = por %p374, %p375
      %p377 = scmp.ne.s32.totalorder %s365, %s366
      %p378 = scmp.eq.s32.totalorder %s41, 1
      %p379 = por %p377, %p378
      %p381 = scmp.ne.s32.totalorder %s366, %s380
      %p382 = scmp.eq.s32.totalorder %s41, 0
      %p383 = por %p381, %p382
      %s385 = sadd.s32 %s384, 1
      %p388 = scmp.eq.s32.totalorder %s35, 1
      %p389 = scmp.ne.s32.totalorder %s384, %s386
      %p390 = scmp.eq.s32.totalorder %s35, 0
      %p391 = por %p389, %p390
      %p392 = scmp.ne.s32.totalorder %s384, %s386
      %p393 = scmp.eq.s32.totalorder %s40, 1
      %p394 = por %p392, %p393
      %p395 = scmp.ne.s32.totalorder %s386, %s387
      %p396 = scmp.eq.s32.totalorder %s40, 0
      %p397 = por %p395, %p396
      %p398 = scmp.ne.s32.totalorder %s386, %s387
      %p399 = scmp.eq.s32.totalorder %s41, 1
      %p400 = por %p398, %p399
      %p402 = scmp.ne.s32.totalorder %s387, %s401
      %p403 = scmp.eq.s32.totalorder %s41, 0
      %p404 = por %p402, %p403
      %s405 = ssub.s32 %s35, %s42
      %p406 = scmp.eq.s32.totalorder %s405, 0
      %s408 = sadd.s32 %s407, 1
      %s409 = scalar_select %p406, %s407, %s408
      %p412 = pneg %p406
      %p413 = scmp.eq.s32.totalorder %s35, 1
      %p414 = por %p412, %p413
      %p415 = scmp.ne.s32.totalorder %s407, %s410
      %p416 = scmp.eq.s32.totalorder %s35, 0
      %p417 = por %p415, %p416
      %p418 = scmp.ne.s32.totalorder %s407, %s410
      %p419 = scmp.eq.s32.totalorder %s40, 1
      %p420 = por %p418, %p419
      %p421 = scmp.ne.s32.totalorder %s410, %s411
      %p422 = scmp.eq.s32.totalorder %s40, 0
      %p423 = por %p421, %p422
      %p424 = scmp.ne.s32.totalorder %s410, %s411
      %p425 = scmp.eq.s32.totalorder %s41, 1
      %p426 = por %p424, %p425
      %p428 = scmp.ne.s32.totalorder %s411, %s427
      %p429 = scmp.eq.s32.totalorder %s41, 0
      %p430 = por %p428, %p429
      %s431 = ssub.s32 %s35, %s42
      %p432 = scmp.eq.s32.totalorder %s431, 0
      %s434 = sadd.s32 %s433, 1
      %s435 = scalar_select %p432, %s433, %s434
      %p438 = pneg %p432
      %p439 = scmp.eq.s32.totalorder %s35, 1
      %p440 = por %p438, %p439
      %p441 = scmp.ne.s32.totalorder %s433, %s436
      %p442 = scmp.eq.s32.totalorder %s35, 0
      %p443 = por %p441, %p442
      %p444 = scmp.ne.s32.totalorder %s433, %s436
      %p445 = scmp.eq.s32.totalorder %s40, 1
      %p446 = por %p444, %p445
      %p447 = scmp.ne.s32.totalorder %s436, %s437
      %p448 = scmp.eq.s32.totalorder %s40, 0
      %p449 = por %p447, %p448
      %p450 = scmp.ne.s32.totalorder %s436, %s437
      %p451 = scmp.eq.s32.totalorder %s41, 1
      %p452 = por %p450, %p451
      %p454 = scmp.ne.s32.totalorder %s437, %s453
      %p455 = scmp.eq.s32.totalorder %s41, 0
      %p456 = por %p454, %p455
      %p457 = scmp.le.s32.totalorder 1, %s35
      %p458 = scmp.lt.s32.totalorder %s35, 3
      %p459 = pnand %p457, %p458
      %p460 = pneg %p459
      // Predicated region
      $region9: #{tpu_custom_call.1} parent=5 // pred_check
        _
      $region10: #{tpu_custom_call.1} parent=5 // pred_check_branch
        %462 = sbr.rel (%p459) target = $region12
      $region11: #{tpu_custom_call.1} parent=5 // pred_region
        %s463 = ssub.s32 %s35, 1
        // Predicated region
        $region13: #{tpu_custom_call.1} parent=11 // pred_check
          %p464 = pneg %p82
        $region14: #{tpu_custom_call.1} parent=11 // pred_check_branch
          %466 = sbr.rel (%p464) target = $region16
        $region15: #{tpu_custom_call.1} parent=11 // pred_region
          _
        $region16: #{tpu_custom_call.1} parent=11 // pred_fallthru
          _
        // Predicated region
        $region17: #{tpu_custom_call.1} parent=11 // pred_check
          %p467 = pneg %p103
        $region18: #{tpu_custom_call.1} parent=11 // pred_check_branch
          %469 = sbr.rel (%p467) target = $region20
        $region19: #{tpu_custom_call.1} parent=11 // pred_region
          _
        $region20: #{tpu_custom_call.1} parent=11 // pred_fallthru
          _
        // Predicated region
        $region21: #{tpu_custom_call.1} parent=11 // pred_check
          %p470 = pneg %p124
        $region22: #{tpu_custom_call.1} parent=11 // pred_check_branch
          %472 = sbr.rel (%p470) target = $region24
        $region23: #{tpu_custom_call.1} parent=11 // pred_region
          _
        $region24: #{tpu_custom_call.1} parent=11 // pred_fallthru
          _
        // Predicated region
        $region25: #{tpu_custom_call.1} parent=11 // pred_check
          %p473 = pneg %p145
        $region26: #{tpu_custom_call.1} parent=11 // pred_check_branch
          %475 = sbr.rel (%p473) target = $region28
        $region27: #{tpu_custom_call.1} parent=11 // pred_region
          _
        $region28: #{tpu_custom_call.1} parent=11 // pred_fallthru
          _
        // Predicated region
        $region29: #{tpu_custom_call.1} parent=11 // pred_check
          %p476 = pneg %p166
        $region30: #{tpu_custom_call.1} parent=11 // pred_check_branch
          %478 = sbr.rel (%p476) target = $region32
        $region31: #{tpu_custom_call.1} parent=11 // pred_region
          _
        $region32: #{tpu_custom_call.1} parent=11 // pred_fallthru
          _
        // Predicated region
        $region33: #{tpu_custom_call.1} parent=11 // pred_check
          %p479 = pneg %p187
        $region34: #{tpu_custom_call.1} parent=11 // pred_check_branch
          %481 = sbr.rel (%p479) target = $region36
        $region35: #{tpu_custom_call.1} parent=11 // pred_region
          _
        $region36: #{tpu_custom_call.1} parent=11 // pred_fallthru
          _
        // Predicated region
        $region37: #{tpu_custom_call.1} parent=11 // pred_check
          %p482 = pneg %p208
        $region38: #{tpu_custom_call.1} parent=11 // pred_check_branch
          %484 = sbr.rel (%p482) target = $region40
        $region39: #{tpu_custom_call.1} parent=11 // pred_region
          %s486 = ssub.s32 512, 512
          %487 = vsyncadd [#allocation6], %s486
          %s488 = sshll.u32 [#allocation5], 4
          %s489 = int_to_ptr.vmem [resolvable:$true] %s488
          %494 = dma.hbm_to_vmem [thread:$0]  %s7, 512, %s489, [#allocation6], 128, 128, 8
        $region40: #{tpu_custom_call.1} parent=11 // pred_fallthru
          _
        // Predicated region
        $region41: #{tpu_custom_call.1} parent=11 // pred_check
          %p495 = pneg %p229
        $region42: #{tpu_custom_call.1} parent=11 // pred_check_branch
          %497 = sbr.rel (%p495) target = $region44
        $region43: #{tpu_custom_call.1} parent=11 // pred_region
          _
        $region44: #{tpu_custom_call.1} parent=11 // pred_fallthru
          _
        // Predicated region
        $region45: #{tpu_custom_call.1} parent=11 // pred_check
          %p498 = pneg %p250
        $region46: #{tpu_custom_call.1} parent=11 // pred_check_branch
          %500 = sbr.rel (%p498) target = $region48
        $region47: #{tpu_custom_call.1} parent=11 // pred_region
          _
        $region48: #{tpu_custom_call.1} parent=11 // pred_fallthru
          _
        // Predicated region
        $region49: #{tpu_custom_call.1} parent=11 // pred_check
          %p501 = pneg %p271
        $region50: #{tpu_custom_call.1} parent=11 // pred_check_branch
          %503 = sbr.rel (%p501) target = $region52
        $region51: #{tpu_custom_call.1} parent=11 // pred_region
          _
        $region52: #{tpu_custom_call.1} parent=11 // pred_fallthru
          _
        // Predicated region
        $region53: #{tpu_custom_call.1} parent=11 // pred_check
          %p504 = pneg %p292
        $region54: #{tpu_custom_call.1} parent=11 // pred_check_branch
          %506 = sbr.rel (%p504) target = $region56
        $region55: #{tpu_custom_call.1} parent=11 // pred_region
          %s508 = ssub.s32 512, 512
          %509 = vsyncadd [#allocation6], %s508
          %s510 = sshll.u32 [#allocation7], 4
          %s511 = int_to_ptr.vmem [resolvable:$true] %s510
          %516 = dma.hbm_to_vmem [thread:$0]  %s11, 512, %s511, [#allocation6], 128, 128, 8
        $region56: #{tpu_custom_call.1} parent=11 // pred_fallthru
          _
        // Predicated region
        $region57: #{tpu_custom_call.1} parent=11 // pred_check
          %p517 = pneg %p313
        $region58: #{tpu_custom_call.1} parent=11 // pred_check_branch
          %519 = sbr.rel (%p517) target = $region60
        $region59: #{tpu_custom_call.1} parent=11 // pred_region
          _
        $region60: #{tpu_custom_call.1} parent=11 // pred_fallthru
          _
        // Predicated region
        $region61: #{tpu_custom_call.1} parent=11 // pred_check
          %p520 = pneg %p334
        $region62: #{tpu_custom_call.1} parent=11 // pred_check_branch
          %522 = sbr.rel (%p520) target = $region64
        $region63: #{tpu_custom_call.1} parent=11 // pred_region
          _
        $region64: #{tpu_custom_call.1} parent=11 // pred_fallthru
          _
        // Predicated region
        $region65: #{tpu_custom_call.1} parent=11 // pred_check
          %p523 = pneg %p355
        $region66: #{tpu_custom_call.1} parent=11 // pred_check_branch
          %525 = sbr.rel (%p523) target = $region68
        $region67: #{tpu_custom_call.1} parent=11 // pred_region
          _
        $region68: #{tpu_custom_call.1} parent=11 // pred_fallthru
          _
        // Predicated region
        $region69: #{tpu_custom_call.1} parent=11 // pred_check
          %p526 = pneg %p376
        $region70: #{tpu_custom_call.1} parent=11 // pred_check_branch
          %528 = sbr.rel (%p526) target = $region72
        $region71: #{tpu_custom_call.1} parent=11 // pred_region
          _
        $region72: #{tpu_custom_call.1} parent=11 // pred_fallthru
          _
        // Predicated region
        $region73: #{tpu_custom_call.1} parent=11 // pred_check
          %p529 = pneg %p397
        $region74: #{tpu_custom_call.1} parent=11 // pred_check_branch
          %531 = sbr.rel (%p529) target = $region76
        $region75: #{tpu_custom_call.1} parent=11 // pred_region
          _
        $region76: #{tpu_custom_call.1} parent=11 // pred_fallthru
          _
      $region12: #{tpu_custom_call.1} parent=5 // pred_fallthru
        _
      %p532 = scmp.lt.s32.totalorder %s35, 2
      // Predicated region
      $region77: #{tpu_custom_call.1} parent=5 // pred_check
        %p533 = pneg %p532
      $region78: #{tpu_custom_call.1} parent=5 // pred_check_branch
        %535 = sbr.rel (%p533) target = $region80
      $region79: #{tpu_custom_call.1} parent=5 // pred_region
        // Predicated region
        $region81: #{tpu_custom_call.1} parent=79 // pred_check
          %p536 = pneg %p55
        $region82: #{tpu_custom_call.1} parent=79 // pred_check_branch
          %538 = sbr.rel (%p536) target = $region84
        $region83: #{tpu_custom_call.1} parent=79 // pred_region
          %s539 = sand.u32 %s45, 1
          %s540 = scalar_lea.sflag [#allocation3], %s539
          %s541 = sand.u32 %s45, 1
          %s542 = smul.addr %s541, 8
          %s543 = scalar_lea.vmem [#allocation2], %s542
          %s545 = ssub.s32 128, 128
          %546 = vsyncadd %s540, %s545
          %s547 = smul.addr %s35, 128
          %s548 = scalar_lea.hbm %s0, %s547
          %s550 = sshll.u32 %s543, 4
          %s551 = int_to_ptr.vmem [resolvable:$true] %s550
          %553 = dma.hbm_to_vmem [thread:$0]  %s548, 128, %s551, %s540
        $region84: #{tpu_custom_call.1} parent=79 // pred_fallthru
          _
      $region80: #{tpu_custom_call.1} parent=5 // pred_fallthru
        _
      %p554 = scmp.le.s32.totalorder 1, %s35
      %p555 = scmp.lt.s32.totalorder %s35, 3
      %p556 = pnand %p554, %p555
      %p557 = pneg %p556
      // Predicated region
      $region85: #{tpu_custom_call.1} parent=5 // pred_check
        _
      $region86: #{tpu_custom_call.1} parent=5 // pred_check_branch
        %559 = sbr.rel (%p556) target = $region88
      $region87: #{tpu_custom_call.1} parent=5 // pred_region
        %s560 = ssub.s32 %s35, 1
        %s561 = sand.u32 %s48, 1
        %s562 = scalar_lea.sflag [#allocation3], %s561
        %s563 = sand.u32 %s48, 1
        %s564 = smul.addr %s563, 8
        %s565 = scalar_lea.vmem [#allocation2], %s564
        // Predicated region
        $region89: #{tpu_custom_call.1} parent=87 // pred_check
          %p566 = pneg %p61
        $region90: #{tpu_custom_call.1} parent=87 // pred_check_branch
          %568 = sbr.rel (%p566) target = $region92
        $region91: #{tpu_custom_call.1} parent=87 // pred_region
          %569 = dma.done %s562, 128
        $region92: #{tpu_custom_call.1} parent=87 // pred_fallthru
          _
        // Predicated region
        $region93: #{tpu_custom_call.1} parent=87 // pred_check
          %p570 = pneg %p208
        $region94: #{tpu_custom_call.1} parent=87 // pred_check_branch
          %572 = sbr.rel (%p570) target = $region96
        $region95: #{tpu_custom_call.1} parent=87 // pred_region
          %573 = dma.done [#allocation6], 512
        $region96: #{tpu_custom_call.1} parent=87 // pred_fallthru
          _
        // Predicated region
        $region97: #{tpu_custom_call.1} parent=87 // pred_check
          %p574 = pneg %p292
        $region98: #{tpu_custom_call.1} parent=87 // pred_check_branch
          %576 = sbr.rel (%p574) target = $region100
        $region99: #{tpu_custom_call.1} parent=87 // pred_region
          %577 = dma.done [#allocation6], 512
        $region100: #{tpu_custom_call.1} parent=87 // pred_fallthru
          _
        %s578 = sand.u32 %s48, 1
        %s579 = scalar_lea.sflag [#allocation3], %s578
        %s580 = sand.u32 %s48, 1
        %s581 = smul.addr %s580, 8
        %s582 = scalar_lea.vmem [#allocation2], %s581
        %p583 = pneg %p61
        %p584 = pneg %p58
        %p585 = pneg %p82
        %p586 = pneg %p79
        %p587 = pneg %p103
        %p588 = pneg %p100
        %p589 = pneg %p124
        %p590 = pneg %p121
        %p591 = pneg %p145
        %p592 = pneg %p142
        %p593 = pneg %p166
        %p594 = pneg %p163
        %p595 = pneg %p187
        %p596 = pneg %p184
        %p597 = pneg %p208
        %p598 = pneg %p205
        %p599 = pneg %p229
        %p600 = pneg %p226
        %p601 = pneg %p250
        %p602 = pneg %p247
        %p603 = pneg %p271
        %p604 = pneg %p268
        %p605 = pneg %p292
        %p606 = pneg %p289
        %p607 = pneg %p313
        %p608 = pneg %p310
        %p609 = pneg %p334
        %p610 = pneg %p331
        %p611 = pneg %p355
        %p612 = pneg %p352
        %p613 = pneg %p376
        %p614 = pneg %p373
        %p615 = pneg %p397
        %p616 = pneg %p394
        %p617 = pneg %p423
        %p618 = pneg %p420
        %s619 = sand.u32 %s410, 1
        %s620 = scalar_lea.sflag [#allocation4], %s619
        %s621 = sand.u32 %s410, 1
        %s622 = smul.addr %s621, 8
        %s623 = scalar_lea.vmem [#allocation8], %s622
        %p624 = pneg %p449
        %p625 = pneg %p446
        %s626 = sand.u32 %s436, 1
        %s627 = scalar_lea.sflag [#allocation10], %s626
        %s628 = sand.u32 %s436, 1
        %s629 = smul.addr %s628, 32
        %s630 = scalar_lea.vmem [#allocation9], %s629
        %v631 = vld [vmem:[%s565] sm:$0xff]
        %v632 = vld [vmem:[%s1] sm:$0xff]
        %v633 = vld [vmem:[%s1 + $0x8] sm:$0xff]
        %v634 = vld [vmem:[%s1 + $0x10] sm:$0xff]
        %v635 = vld [vmem:[%s1 + $0x18] sm:$0xff]
        %v636 = vld [vmem:[%s2] sm:$0x1]
        %v638 = vlaneseq
        %v639 = vshrl.u32 %v638, 7
        %v640 = vsub.s32 0, %v639
        %v641 = vrot.slane %v636, %v640
        %vm643 = vcmask 261120
        %v645 = vsel %vm643, %v631, 0
        %647 = vmatprep.subr.mxu0 0.0
        %648 = vmatpush1.msra.mxu0 %v632
        %649 = vmatprep.subr.mxu0 0.0
        %650 = vmatpush1.msra.mxu0 %v633
        %651 = vmatprep.subr.mxu0 0.0
        %652 = vmatpush1.msra.mxu0 %v634
        %653 = vmatprep.subr.mxu0 0.0
        %654 = vmatpush1.msra.mxu0 %v635
        %655 = vmatprep.subr.mxu0 0.0
        %656 = vmatpush1.msra.mxu0 0.0
        %657 = vmatprep.subr.mxu0 0.0
        %658 = vmatpush1.msra.mxu0 0.0
        %659 = vmatprep.subr.mxu0 0.0
        %660 = vmatpush1.msra.mxu0 0.0
        %661 = vmatprep.subr.mxu0 0.0
        %662 = vmatpush1.msra.mxu0 0.0
        %663 = vmatprep.subr.mxu0 0.0
        %664 = vmatpush1.msra.mxu0 0.0
        %665 = vmatprep.subr.mxu0 0.0
        %666 = vmatpush1.msra.mxu0 0.0
        %667 = vmatprep.subr.mxu0 0.0
        %668 = vmatpush1.msra.mxu0 0.0
        %669 = vmatprep.subr.mxu0 0.0
        %670 = vmatpush1.msra.mxu0 0.0
        %671 = vmatprep.subr.mxu0 0.0
        %672 = vmatpush1.msra.mxu0 0.0
        %673 = vmatprep.subr.mxu0 0.0
        %674 = vmatpush1.msra.mxu0 0.0
        %675 = vmatprep.subr.mxu0 0.0
        %676 = vmatpush1.msra.mxu0 0.0
        %677 = vmatprep.subr.mxu0 0.0
        %678 = vmatpush1.msra.mxu0 0.0
        %679 = vmatprep.subr.mxu0 0.0
        %680 = vmatpush1.msra.mxu0 0.0
        %681 = vmatprep.subr.mxu0 0.0
        %682 = vmatpush1.msra.mxu0 0.0
        %683 = vmatprep.subr.mxu0 0.0
        %684 = vmatpush1.msra.mxu0 0.0
        %685 = vmatprep.subr.mxu0 0.0
        %686 = vmatpush1.msra.mxu0 0.0
        %687 = vmatprep.subr.mxu0 0.0
        %688 = vmatpush1.msra.mxu0 0.0
        %689 = vmatprep.subr.mxu0 0.0
        %690 = vmatpush1.msra.mxu0 0.0
        %691 = vmatprep.subr.mxu0 0.0
        %692 = vmatpush1.msra.mxu0 0.0
        %693 = vmatprep.subr.mxu0 0.0
        %694 = vmatpush1.msra.mxu0 0.0
        %695 = vmatprep.subr.mxu0 0.0
        %696 = vmatpush1.msra.mxu0 0.0
        %697 = vmatprep.subr.mxu0 0.0
        %698 = vmatpush1.msra.mxu0 0.0
        %699 = vmatprep.subr.mxu0 0.0
        %700 = vmatpush1.msra.mxu0 0.0
        %701 = vmatprep.subr.mxu0 0.0
        %702 = vmatpush1.msra.mxu0 0.0
        %703 = vmatprep.subr.mxu0 0.0
        %704 = vmatpush1.msra.mxu0 0.0
        %705 = vmatprep.subr.mxu0 0.0
        %706 = vmatpush1.msra.mxu0 0.0
        %707 = vmatprep.subr.mxu0 0.0
        %708 = vmatpush1.msra.mxu0 0.0
        %709 = vmatprep.subr.mxu0 0.0
        %710 = vmatpush1.msra.mxu0 0.0
        %711 = vmatprep.mubr.f32.mxu0 0.0
        %712 = vmatmul.mubr.f32.gmra.mrb[0].mxu0 %v645
        %v713 = vpop.f32.mrb[0].mxu0
        %v714 = vadd.f32 %v641, %v713
        %v715 = vpop.f32.mrb[0].mxu0
        %716 = vdwg.mxu0
        %v717 = vld [vmem:[%s3] sm:$0xff]
        %v718 = vld [vmem:[%s3 + $0x8] sm:$0xff]
        %v719 = vld [vmem:[%s3 + $0x10] sm:$0xff]
        %v720 = vld [vmem:[%s3 + $0x18] sm:$0xff]
        %v721 = vld [vmem:[%s4] sm:$0x1]
        %v723 = vlaneseq
        %v724 = vshrl.u32 %v723, 7
        %v725 = vsub.s32 0, %v724
        %v726 = vrot.slane %v721, %v725
        %728 = vmatprep.subr.mxu0 0.0
        %729 = vmatpush1.msra.mxu0 %v717
        %730 = vmatprep.subr.mxu0 0.0
        %731 = vmatpush1.msra.mxu0 %v718
        %732 = vmatprep.subr.mxu0 0.0
        %733 = vmatpush1.msra.mxu0 %v719
        %734 = vmatprep.subr.mxu0 0.0
        %735 = vmatpush1.msra.mxu0 %v720
        %736 = vmatprep.subr.mxu0 0.0
        %737 = vmatpush1.msra.mxu0 0.0
        %738 = vmatprep.subr.mxu0 0.0
        %739 = vmatpush1.msra.mxu0 0.0
        %740 = vmatprep.subr.mxu0 0.0
        %741 = vmatpush1.msra.mxu0 0.0
        %742 = vmatprep.subr.mxu0 0.0
        %743 = vmatpush1.msra.mxu0 0.0
        %744 = vmatprep.subr.mxu0 0.0
        %745 = vmatpush1.msra.mxu0 0.0
        %746 = vmatprep.subr.mxu0 0.0
        %747 = vmatpush1.msra.mxu0 0.0
        %748 = vmatprep.subr.mxu0 0.0
        %749 = vmatpush1.msra.mxu0 0.0
        %750 = vmatprep.subr.mxu0 0.0
        %751 = vmatpush1.msra.mxu0 0.0
        %752 = vmatprep.subr.mxu0 0.0
        %753 = vmatpush1.msra.mxu0 0.0
        %754 = vmatprep.subr.mxu0 0.0
        %755 = vmatpush1.msra.mxu0 0.0
        %756 = vmatprep.subr.mxu0 0.0
        %757 = vmatpush1.msra.mxu0 0.0
        %758 = vmatprep.subr.mxu0 0.0
        %759 = vmatpush1.msra.mxu0 0.0
        %760 = vmatprep.subr.mxu0 0.0
        %761 = vmatpush1.msra.mxu0 0.0
        %762 = vmatprep.subr.mxu0 0.0
        %763 = vmatpush1.msra.mxu0 0.0
        %764 = vmatprep.subr.mxu0 0.0
        %765 = vmatpush1.msra.mxu0 0.0
        %766 = vmatprep.subr.mxu0 0.0
        %767 = vmatpush1.msra.mxu0 0.0
        %768 = vmatprep.subr.mxu0 0.0
        %769 = vmatpush1.msra.mxu0 0.0
        %770 = vmatprep.subr.mxu0 0.0
        %771 = vmatpush1.msra.mxu0 0.0
        %772 = vmatprep.subr.mxu0 0.0
        %773 = vmatpush1.msra.mxu0 0.0
        %774 = vmatprep.subr.mxu0 0.0
        %775 = vmatpush1.msra.mxu0 0.0
        %776 = vmatprep.subr.mxu0 0.0
        %777 = vmatpush1.msra.mxu0 0.0
        %778 = vmatprep.subr.mxu0 0.0
        %779 = vmatpush1.msra.mxu0 0.0
        %780 = vmatprep.subr.mxu0 0.0
        %781 = vmatpush1.msra.mxu0 0.0
        %782 = vmatprep.subr.mxu0 0.0
        %783 = vmatpush1.msra.mxu0 0.0
        %784 = vmatprep.subr.mxu0 0.0
        %785 = vmatpush1.msra.mxu0 0.0
        %786 = vmatprep.subr.mxu0 0.0
        %787 = vmatpush1.msra.mxu0 0.0
        %788 = vmatprep.subr.mxu0 0.0
        %789 = vmatpush1.msra.mxu0 0.0
        %790 = vmatprep.subr.mxu0 0.0
        %791 = vmatpush1.msra.mxu0 0.0
        %792 = vmatprep.mubr.f32.mxu0 0.0
        %793 = vmatmul.mubr.f32.gmra.mrb[0].mxu0 %v645
        %v794 = vpop.f32.mrb[0].mxu0
        %v795 = vadd.f32 %v726, %v794
        %v796 = vpop.f32.mrb[0].mxu0
        %797 = vdwg.mxu0
        %v798 = vld [vmem:[%s5] sm:$0xff]
        %v799 = vld [vmem:[%s5 + $0x8] sm:$0xff]
        %v800 = vld [vmem:[%s5 + $0x10] sm:$0xff]
        %v801 = vld [vmem:[%s5 + $0x18] sm:$0xff]
        %v802 = vld [vmem:[%s6] sm:$0x1]
        %v804 = vlaneseq
        %v805 = vshrl.u32 %v804, 7
        %v806 = vsub.s32 0, %v805
        %v807 = vrot.slane %v802, %v806
        %809 = vmatprep.subr.mxu0 0.0
        %810 = vmatpush1.msra.mxu0 %v798
        %811 = vmatprep.subr.mxu0 0.0
        %812 = vmatpush1.msra.mxu0 %v799
        %813 = vmatprep.subr.mxu0 0.0
        %814 = vmatpush1.msra.mxu0 %v800
        %815 = vmatprep.subr.mxu0 0.0
        %816 = vmatpush1.msra.mxu0 %v801
        %817 = vmatprep.subr.mxu0 0.0
        %818 = vmatpush1.msra.mxu0 0.0
        %819 = vmatprep.subr.mxu0 0.0
        %820 = vmatpush1.msra.mxu0 0.0
        %821 = vmatprep.subr.mxu0 0.0
        %822 = vmatpush1.msra.mxu0 0.0
        %823 = vmatprep.subr.mxu0 0.0
        %824 = vmatpush1.msra.mxu0 0.0
        %825 = vmatprep.subr.mxu0 0.0
        %826 = vmatpush1.msra.mxu0 0.0
        %827 = vmatprep.subr.mxu0 0.0
        %828 = vmatpush1.msra.mxu0 0.0
        %829 = vmatprep.subr.mxu0 0.0
        %830 = vmatpush1.msra.mxu0 0.0
        %831 = vmatprep.subr.mxu0 0.0
        %832 = vmatpush1.msra.mxu0 0.0
        %833 = vmatprep.subr.mxu0 0.0
        %834 = vmatpush1.msra.mxu0 0.0
        %835 = vmatprep.subr.mxu0 0.0
        %836 = vmatpush1.msra.mxu0 0.0
        %837 = vmatprep.subr.mxu0 0.0
        %838 = vmatpush1.msra.mxu0 0.0
        %839 = vmatprep.subr.mxu0 0.0
        %840 = vmatpush1.msra.mxu0 0.0
        %841 = vmatprep.subr.mxu0 0.0
        %842 = vmatpush1.msra.mxu0 0.0
        %843 = vmatprep.subr.mxu0 0.0
        %844 = vmatpush1.msra.mxu0 0.0
        %845 = vmatprep.subr.mxu0 0.0
        %846 = vmatpush1.msra.mxu0 0.0
        %847 = vmatprep.subr.mxu0 0.0
        %848 = vmatpush1.msra.mxu0 0.0
        %849 = vmatprep.subr.mxu0 0.0
        %850 = vmatpush1.msra.mxu0 0.0
        %851 = vmatprep.subr.mxu0 0.0
        %852 = vmatpush1.msra.mxu0 0.0
        %853 = vmatprep.subr.mxu0 0.0
        %854 = vmatpush1.msra.mxu0 0.0
        %855 = vmatprep.subr.mxu0 0.0
        %856 = vmatpush1.msra.mxu0 0.0
        %857 = vmatprep.subr.mxu0 0.0
        %858 = vmatpush1.msra.mxu0 0.0
        %859 = vmatprep.subr.mxu0 0.0
        %860 = vmatpush1.msra.mxu0 0.0
        %861 = vmatprep.subr.mxu0 0.0
        %862 = vmatpush1.msra.mxu0 0.0
        %863 = vmatprep.subr.mxu0 0.0
        %864 = vmatpush1.msra.mxu0 0.0
        %865 = vmatprep.subr.mxu0 0.0
        %866 = vmatpush1.msra.mxu0 0.0
        %867 = vmatprep.subr.mxu0 0.0
        %868 = vmatpush1.msra.mxu0 0.0
        %869 = vmatprep.subr.mxu0 0.0
        %870 = vmatpush1.msra.mxu0 0.0
        %871 = vmatprep.subr.mxu0 0.0
        %872 = vmatpush1.msra.mxu0 0.0
        %873 = vmatprep.mubr.f32.mxu0 0.0
        %874 = vmatmul.mubr.f32.gmra.mrb[0].mxu0 %v645
        %v875 = vpop.f32.mrb[0].mxu0
        %v876 = vadd.f32 %v807, %v875
        %v877 = vpop.f32.mrb[0].mxu0
        %878 = vdwg.mxu0
        %v879 = vld [vmem:[#allocation5] sm:$0xff]
        %v880 = vld [vmem:[#allocation5 + $0x8] sm:$0xff]
        %v881 = vld [vmem:[#allocation5 + $0x10] sm:$0xff]
        %v882 = vld [vmem:[#allocation5 + $0x18] sm:$0xff]
        %vm883 = vcmask 64512
        %v885 = vsel %vm883, %v714, 0
        %v888 = vsel %vm883, %v795, 0
        %890 = vmatprep.subr.mxu0 0.0
        %891 = vmatpush1.xpose.msra.mxu0 %v888
        %892 = vmatprep.subr.mxu0 0.0
        %893 = vmatpush1.xpose.msra.mxu0 0.0
        %894 = vmatprep.subr.mxu0 0.0
        %895 = vmatpush1.xpose.msra.mxu0 0.0
        %896 = vmatprep.subr.mxu0 0.0
        %897 = vmatpush1.xpose.msra.mxu0 0.0
        %898 = vmatprep.subr.mxu0 0.0
        %899 = vmatpush1.xpose.msra.mxu0 0.0
        %900 = vmatprep.subr.mxu0 0.0
        %901 = vmatpush1.xpose.msra.mxu0 0.0
        %902 = vmatprep.subr.mxu0 0.0
        %903 = vmatpush1.xpose.msra.mxu0 0.0
        %904 = vmatprep.subr.mxu0 0.0
        %905 = vmatpush1.xpose.msra.mxu0 0.0
        %906 = vmatprep.subr.mxu0 0.0
        %907 = vmatpush1.xpose.msra.mxu0 0.0
        %908 = vmatprep.subr.mxu0 0.0
        %909 = vmatpush1.xpose.msra.mxu0 0.0
        %910 = vmatprep.subr.mxu0 0.0
        %911 = vmatpush1.xpose.msra.mxu0 0.0
        %912 = vmatprep.subr.mxu0 0.0
        %913 = vmatpush1.xpose.msra.mxu0 0.0
        %914 = vmatprep.subr.mxu0 0.0
        %915 = vmatpush1.xpose.msra.mxu0 0.0
        %916 = vmatprep.subr.mxu0 0.0
        %917 = vmatpush1.xpose.msra.mxu0 0.0
        %918 = vmatprep.subr.mxu0 0.0
        %919 = vmatpush1.xpose.msra.mxu0 0.0
        %920 = vmatprep.subr.mxu0 0.0
        %921 = vmatpush1.xpose.msra.mxu0 0.0
        %922 = vmatprep.subr.mxu0 0.0
        %923 = vmatpush1.xpose.msra.mxu0 0.0
        %924 = vmatprep.subr.mxu0 0.0
        %925 = vmatpush1.xpose.msra.mxu0 0.0
        %926 = vmatprep.subr.mxu0 0.0
        %927 = vmatpush1.xpose.msra.mxu0 0.0
        %928 = vmatprep.subr.mxu0 0.0
        %929 = vmatpush1.xpose.msra.mxu0 0.0
        %930 = vmatprep.subr.mxu0 0.0
        %931 = vmatpush1.xpose.msra.mxu0 0.0
        %932 = vmatprep.subr.mxu0 0.0
        %933 = vmatpush1.xpose.msra.mxu0 0.0
        %934 = vmatprep.subr.mxu0 0.0
        %935 = vmatpush1.xpose.msra.mxu0 0.0
        %936 = vmatprep.subr.mxu0 0.0
        %937 = vmatpush1.xpose.msra.mxu0 0.0
        %938 = vmatprep.subr.mxu0 0.0
        %939 = vmatpush1.xpose.msra.mxu0 0.0
        %940 = vmatprep.subr.mxu0 0.0
        %941 = vmatpush1.xpose.msra.mxu0 0.0
        %942 = vmatprep.subr.mxu0 0.0
        %943 = vmatpush1.xpose.msra.mxu0 0.0
        %944 = vmatprep.subr.mxu0 0.0
        %945 = vmatpush1.xpose.msra.mxu0 0.0
        %946 = vmatprep.subr.mxu0 0.0
        %947 = vmatpush1.xpose.msra.mxu0 0.0
        %948 = vmatprep.subr.mxu0 0.0
        %949 = vmatpush1.xpose.msra.mxu0 0.0
        %950 = vmatprep.subr.mxu0 0.0
        %951 = vmatpush1.xpose.msra.mxu0 0.0
        %952 = vmatprep.subr.mxu0 0.0
        %953 = vmatpush1.xpose.msra.mxu0 0.0
        %954 = vmatprep.mubr.f32.mxu0 0.0
        %955 = vmatmul.mubr.f32.gmra.mrb[0].mxu0 %v885
        %v956 = vpop.f32.mrb[0].mxu0
        %v957 = vadd.f32 0.0, %v956
        %v958 = vpop.f32.mrb[0].mxu0
        %959 = vdwg.mxu0
        %v960 = vmul.f32 %v957, 0.35355338
        %v961 = vsel %vm883, %v960, -inf
        %962 = vmax.xlane.f32.xlu0 %v961
        %v963 = vpop.xlane.xlu0 %962
        %v964 = vsub.f32 %v960, %v963
        %v965 = vmul.f32 %v964, 1.442695
        %v966 = vpow.pop %v965
        %v967 = vsel %vm883, %v966, 0.0
        %968 = vadd.xlane.f32.xlu0 %v967
        %v969 = vpop.xlane.xlu0 %968
        %v970 = vrcp.pop %v969
        %v971 = vmul.f32 %v966, %v970
        %972 = vst.msk [vmem:[%s630] sm:$0xff] %vm883, %v971
        %v974 = vsel %vm883, %v971, 0
        %976 = vmatprep.subr.mxu0 0.0
        %977 = vmatpush1.msra.mxu0 %v876
        %978 = vmatprep.subr.mxu0 0.0
        %979 = vmatpush1.msra.mxu0 0.0
        %980 = vmatprep.subr.mxu0 0.0
        %981 = vmatpush1.msra.mxu0 0.0
        %982 = vmatprep.subr.mxu0 0.0
        %983 = vmatpush1.msra.mxu0 0.0
        %984 = vmatprep.subr.mxu0 0.0
        %985 = vmatpush1.msra.mxu0 0.0
        %986 = vmatprep.subr.mxu0 0.0
        %987 = vmatpush1.msra.mxu0 0.0
        %988 = vmatprep.subr.mxu0 0.0
        %989 = vmatpush1.msra.mxu0 0.0
        %990 = vmatprep.subr.mxu0 0.0
        %991 = vmatpush1.msra.mxu0 0.0
        %992 = vmatprep.subr.mxu0 0.0
        %993 = vmatpush1.msra.mxu0 0.0
        %994 = vmatprep.subr.mxu0 0.0
        %995 = vmatpush1.msra.mxu0 0.0
        %996 = vmatprep.subr.mxu0 0.0
        %997 = vmatpush1.msra.mxu0 0.0
        %998 = vmatprep.subr.mxu0 0.0
        %999 = vmatpush1.msra.mxu0 0.0
        %1000 = vmatprep.subr.mxu0 0.0
        %1001 = vmatpush1.msra.mxu0 0.0
        %1002 = vmatprep.subr.mxu0 0.0
        %1003 = vmatpush1.msra.mxu0 0.0
        %1004 = vmatprep.subr.mxu0 0.0
        %1005 = vmatpush1.msra.mxu0 0.0
        %1006 = vmatprep.subr.mxu0 0.0
        %1007 = vmatpush1.msra.mxu0 0.0
        %1008 = vmatprep.subr.mxu0 0.0
        %1009 = vmatpush1.msra.mxu0 0.0
        %1010 = vmatprep.subr.mxu0 0.0
        %1011 = vmatpush1.msra.mxu0 0.0
        %1012 = vmatprep.subr.mxu0 0.0
        %1013 = vmatpush1.msra.mxu0 0.0
        %1014 = vmatprep.subr.mxu0 0.0
        %1015 = vmatpush1.msra.mxu0 0.0
        %1016 = vmatprep.subr.mxu0 0.0
        %1017 = vmatpush1.msra.mxu0 0.0
        %1018 = vmatprep.subr.mxu0 0.0
        %1019 = vmatpush1.msra.mxu0 0.0
        %1020 = vmatprep.subr.mxu0 0.0
        %1021 = vmatpush1.msra.mxu0 0.0
        %1022 = vmatprep.subr.mxu0 0.0
        %1023 = vmatpush1.msra.mxu0 0.0
        %1024 = vmatprep.subr.mxu0 0.0
        %1025 = vmatpush1.msra.mxu0 0.0
        %1026 = vmatprep.subr.mxu0 0.0
        %1027 = vmatpush1.msra.mxu0 0.0
        %1028 = vmatprep.subr.mxu0 0.0
        %1029 = vmatpush1.msra.mxu0 0.0
        %1030 = vmatprep.subr.mxu0 0.0
        %1031 = vmatpush1.msra.mxu0 0.0
        %1032 = vmatprep.subr.mxu0 0.0
        %1033 = vmatpush1.msra.mxu0 0.0
        %1034 = vmatprep.subr.mxu0 0.0
        %1035 = vmatpush1.msra.mxu0 0.0
        %1036 = vmatprep.subr.mxu0 0.0
        %1037 = vmatpush1.msra.mxu0 0.0
        %1038 = vmatprep.subr.mxu0 0.0
        %1039 = vmatpush1.msra.mxu0 0.0
        %1040 = vmatprep.mubr.f32.mxu0 0.0
        %1041 = vmatmul.mubr.f32.gmra.mrb[0].mxu0 %v974
        %v1042 = vpop.f32.mrb[0].mxu0
        %v1043 = vadd.f32 0.0, %v1042
        %v1044 = vpop.f32.mrb[0].mxu0
        %1045 = vdwg.mxu0
        %1046 = vrot.lane.b32.xlu0 %v714, 120
        %v1047 = vpop.permute.xlu0 %1046
        %1048 = vrot.lane.b32.xlu0 %v795, 120
        %v1049 = vpop.permute.xlu0 %1048
        %v1050 = vsel %vm883, %v1047, 0
        %v1052 = vsel %vm883, %v1049, 0
        %1054 = vmatprep.subr.mxu0 0.0
        %1055 = vmatpush1.xpose.msra.mxu0 %v1052
        %1056 = vmatprep.subr.mxu0 0.0
        %1057 = vmatpush1.xpose.msra.mxu0 0.0
        %1058 = vmatprep.subr.mxu0 0.0
        %1059 = vmatpush1.xpose.msra.mxu0 0.0
        %1060 = vmatprep.subr.mxu0 0.0
        %1061 = vmatpush1.xpose.msra.mxu0 0.0
        %1062 = vmatprep.subr.mxu0 0.0
        %1063 = vmatpush1.xpose.msra.mxu0 0.0
        %1064 = vmatprep.subr.mxu0 0.0
        %1065 = vmatpush1.xpose.msra.mxu0 0.0
        %1066 = vmatprep.subr.mxu0 0.0
        %1067 = vmatpush1.xpose.msra.mxu0 0.0
        %1068 = vmatprep.subr.mxu0 0.0
        %1069 = vmatpush1.xpose.msra.mxu0 0.0
        %1070 = vmatprep.subr.mxu0 0.0
        %1071 = vmatpush1.xpose.msra.mxu0 0.0
        %1072 = vmatprep.subr.mxu0 0.0
        %1073 = vmatpush1.xpose.msra.mxu0 0.0
        %1074 = vmatprep.subr.mxu0 0.0
        %1075 = vmatpush1.xpose.msra.mxu0 0.0
        %1076 = vmatprep.subr.mxu0 0.0
        %1077 = vmatpush1.xpose.msra.mxu0 0.0
        %1078 = vmatprep.subr.mxu0 0.0
        %1079 = vmatpush1.xpose.msra.mxu0 0.0
        %1080 = vmatprep.subr.mxu0 0.0
        %1081 = vmatpush1.xpose.msra.mxu0 0.0
        %1082 = vmatprep.subr.mxu0 0.0
        %1083 = vmatpush1.xpose.msra.mxu0 0.0
        %1084 = vmatprep.subr.mxu0 0.0
        %1085 = vmatpush1.xpose.msra.mxu0 0.0
        %1086 = vmatprep.subr.mxu0 0.0
        %1087 = vmatpush1.xpose.msra.mxu0 0.0
        %1088 = vmatprep.subr.mxu0 0.0
        %1089 = vmatpush1.xpose.msra.mxu0 0.0
        %1090 = vmatprep.subr.mxu0 0.0
        %1091 = vmatpush1.xpose.msra.mxu0 0.0
        %1092 = vmatprep.subr.mxu0 0.0
        %1093 = vmatpush1.xpose.msra.mxu0 0.0
        %1094 = vmatprep.subr.mxu0 0.0
        %1095 = vmatpush1.xpose.msra.mxu0 0.0
        %1096 = vmatprep.subr.mxu0 0.0
        %1097 = vmatpush1.xpose.msra.mxu0 0.0
        %1098 = vmatprep.subr.mxu0 0.0
        %1099 = vmatpush1.xpose.msra.mxu0 0.0
        %1100 = vmatprep.subr.mxu0 0.0
        %1101 = vmatpush1.xpose.msra.mxu0 0.0
        %1102 = vmatprep.subr.mxu0 0.0
        %1103 = vmatpush1.xpose.msra.mxu0 0.0
        %1104 = vmatprep.subr.mxu0 0.0
        %1105 = vmatpush1.xpose.msra.mxu0 0.0
        %1106 = vmatprep.subr.mxu0 0.0
        %1107 = vmatpush1.xpose.msra.mxu0 0.0
        %1108 = vmatprep.subr.mxu0 0.0
        %1109 = vmatpush1.xpose.msra.mxu0 0.0
        %1110 = vmatprep.subr.mxu0 0.0
        %1111 = vmatpush1.xpose.msra.mxu0 0.0
        %1112 = vmatprep.subr.mxu0 0.0
        %1113 = vmatpush1.xpose.msra.mxu0 0.0
        %1114 = vmatprep.subr.mxu0 0.0
        %1115 = vmatpush1.xpose.msra.mxu0 0.0
        %1116 = vmatprep.subr.mxu0 0.0
        %1117 = vmatpush1.xpose.msra.mxu0 0.0
        %1118 = vmatprep.mubr.f32.mxu0 0.0
        %1119 = vmatmul.mubr.f32.gmra.mrb[0].mxu0 %v1050
        %v1120 = vpop.f32.mrb[0].mxu0
        %v1121 = vadd.f32 0.0, %v1120
        %v1122 = vpop.f32.mrb[0].mxu0
        %1123 = vdwg.mxu0
        %v1124 = vmul.f32 %v1121, 0.35355338
        %v1125 = vsel %vm883, %v1124, -inf
        %1126 = vmax.xlane.f32.xlu0 %v1125
        %v1127 = vpop.xlane.xlu0 %1126
        %v1128 = vsub.f32 %v1124, %v1127
        %v1129 = vmul.f32 %v1128, 1.442695
        %v1130 = vpow.pop %v1129
        %v1131 = vsel %vm883, %v1130, 0.0
        %1132 = vadd.xlane.f32.xlu0 %v1131
        %v1133 = vpop.xlane.xlu0 %1132
        %v1134 = vrcp.pop %v1133
        %v1135 = vmul.f32 %v1130, %v1134
        %s1136 = scalar_lea.vmem %s630, 8 [#allocation9]
        %1137 = vst.msk [vmem:[%s1136] sm:$0xff] %vm883, %v1135
        %1139 = vrot.lane.b32.xlu0 %v876, 120
        %v1140 = vpop.permute.xlu0 %1139
        %v1143 = vsel %vm883, %v1135, 0
        %1145 = vmatprep.subr.mxu0 0.0
        %1146 = vmatpush1.msra.mxu0 %v1140
        %1147 = vmatprep.subr.mxu0 0.0
        %1148 = vmatpush1.msra.mxu0 0.0
        %1149 = vmatprep.subr.mxu0 0.0
        %1150 = vmatpush1.msra.mxu0 0.0
        %1151 = vmatprep.subr.mxu0 0.0
        %1152 = vmatpush1.msra.mxu0 0.0
        %1153 = vmatprep.subr.mxu0 0.0
        %1154 = vmatpush1.msra.mxu0 0.0
        %1155 = vmatprep.subr.mxu0 0.0
        %1156 = vmatpush1.msra.mxu0 0.0
        %1157 = vmatprep.subr.mxu0 0.0
        %1158 = vmatpush1.msra.mxu0 0.0
        %1159 = vmatprep.subr.mxu0 0.0
        %1160 = vmatpush1.msra.mxu0 0.0
        %1161 = vmatprep.subr.mxu0 0.0
        %1162 = vmatpush1.msra.mxu0 0.0
        %1163 = vmatprep.subr.mxu0 0.0
        %1164 = vmatpush1.msra.mxu0 0.0
        %1165 = vmatprep.subr.mxu0 0.0
        %1166 = vmatpush1.msra.mxu0 0.0
        %1167 = vmatprep.subr.mxu0 0.0
        %1168 = vmatpush1.msra.mxu0 0.0
        %1169 = vmatprep.subr.mxu0 0.0
        %1170 = vmatpush1.msra.mxu0 0.0
        %1171 = vmatprep.subr.mxu0 0.0
        %1172 = vmatpush1.msra.mxu0 0.0
        %1173 = vmatprep.subr.mxu0 0.0
        %1174 = vmatpush1.msra.mxu0 0.0
        %1175 = vmatprep.subr.mxu0 0.0
        %1176 = vmatpush1.msra.mxu0 0.0
        %1177 = vmatprep.subr.mxu0 0.0
        %1178 = vmatpush1.msra.mxu0 0.0
        %1179 = vmatprep.subr.mxu0 0.0
        %1180 = vmatpush1.msra.mxu0 0.0
        %1181 = vmatprep.subr.mxu0 0.0
        %1182 = vmatpush1.msra.mxu0 0.0
        %1183 = vmatprep.subr.mxu0 0.0
        %1184 = vmatpush1.msra.mxu0 0.0
        %1185 = vmatprep.subr.mxu0 0.0
        %1186 = vmatpush1.msra.mxu0 0.0
        %1187 = vmatprep.subr.mxu0 0.0
        %1188 = vmatpush1.msra.mxu0 0.0
        %1189 = vmatprep.subr.mxu0 0.0
        %1190 = vmatpush1.msra.mxu0 0.0
        %1191 = vmatprep.subr.mxu0 0.0
        %1192 = vmatpush1.msra.mxu0 0.0
        %1193 = vmatprep.subr.mxu0 0.0
        %1194 = vmatpush1.msra.mxu0 0.0
        %1195 = vmatprep.subr.mxu0 0.0
        %1196 = vmatpush1.msra.mxu0 0.0
        %1197 = vmatprep.subr.mxu0 0.0
        %1198 = vmatpush1.msra.mxu0 0.0
        %1199 = vmatprep.subr.mxu0 0.0
        %1200 = vmatpush1.msra.mxu0 0.0
        %1201 = vmatprep.subr.mxu0 0.0
        %1202 = vmatpush1.msra.mxu0 0.0
        %1203 = vmatprep.subr.mxu0 0.0
        %1204 = vmatpush1.msra.mxu0 0.0
        %1205 = vmatprep.subr.mxu0 0.0
        %1206 = vmatpush1.msra.mxu0 0.0
        %1207 = vmatprep.subr.mxu0 0.0
        %1208 = vmatpush1.msra.mxu0 0.0
        %1209 = vmatprep.mubr.f32.mxu0 0.0
        %1210 = vmatmul.mubr.f32.gmra.mrb[0].mxu0 %v1143
        %v1211 = vpop.f32.mrb[0].mxu0
        %v1212 = vadd.f32 0.0, %v1211
        %v1213 = vpop.f32.mrb[0].mxu0
        %1214 = vdwg.mxu0
        %v1216 = vsel %vm883, %v1212, 0
        %1218 = vmatprep.subr.mxu0 0.0
        %1219 = vmatpush1.msra.mxu0 %v880
        %1220 = vmatprep.subr.mxu0 0.0
        %1221 = vmatpush1.msra.mxu0 0.0
        %1222 = vmatprep.subr.mxu0 0.0
        %1223 = vmatpush1.msra.mxu0 0.0
        %1224 = vmatprep.subr.mxu0 0.0
        %1225 = vmatpush1.msra.mxu0 0.0
        %1226 = vmatprep.subr.mxu0 0.0
        %1227 = vmatpush1.msra.mxu0 0.0
        %1228 = vmatprep.subr.mxu0 0.0
        %1229 = vmatpush1.msra.mxu0 0.0
        %1230 = vmatprep.subr.mxu0 0.0
        %1231 = vmatpush1.msra.mxu0 0.0
        %1232 = vmatprep.subr.mxu0 0.0
        %1233 = vmatpush1.msra.mxu0 0.0
        %1234 = vmatprep.subr.mxu0 0.0
        %1235 = vmatpush1.msra.mxu0 0.0
        %1236 = vmatprep.subr.mxu0 0.0
        %1237 = vmatpush1.msra.mxu0 0.0
        %1238 = vmatprep.subr.mxu0 0.0
        %1239 = vmatpush1.msra.mxu0 0.0
        %1240 = vmatprep.subr.mxu0 0.0
        %1241 = vmatpush1.msra.mxu0 0.0
        %1242 = vmatprep.subr.mxu0 0.0
        %1243 = vmatpush1.msra.mxu0 0.0
        %1244 = vmatprep.subr.mxu0 0.0
        %1245 = vmatpush1.msra.mxu0 0.0
        %1246 = vmatprep.subr.mxu0 0.0
        %1247 = vmatpush1.msra.mxu0 0.0
        %1248 = vmatprep.subr.mxu0 0.0
        %1249 = vmatpush1.msra.mxu0 0.0
        %1250 = vmatprep.subr.mxu0 0.0
        %1251 = vmatpush1.msra.mxu0 0.0
        %1252 = vmatprep.subr.mxu0 0.0
        %1253 = vmatpush1.msra.mxu0 0.0
        %1254 = vmatprep.subr.mxu0 0.0
        %1255 = vmatpush1.msra.mxu0 0.0
        %1256 = vmatprep.subr.mxu0 0.0
        %1257 = vmatpush1.msra.mxu0 0.0
        %1258 = vmatprep.subr.mxu0 0.0
        %1259 = vmatpush1.msra.mxu0 0.0
        %1260 = vmatprep.subr.mxu0 0.0
        %1261 = vmatpush1.msra.mxu0 0.0
        %1262 = vmatprep.subr.mxu0 0.0
        %1263 = vmatpush1.msra.mxu0 0.0
        %1264 = vmatprep.subr.mxu0 0.0
        %1265 = vmatpush1.msra.mxu0 0.0
        %1266 = vmatprep.subr.mxu0 0.0
        %1267 = vmatpush1.msra.mxu0 0.0
        %1268 = vmatprep.subr.mxu0 0.0
        %1269 = vmatpush1.msra.mxu0 0.0
        %1270 = vmatprep.subr.mxu0 0.0
        %1271 = vmatpush1.msra.mxu0 0.0
        %1272 = vmatprep.subr.mxu0 0.0
        %1273 = vmatpush1.msra.mxu0 0.0
        %1274 = vmatprep.subr.mxu0 0.0
        %1275 = vmatpush1.msra.mxu0 0.0
        %1276 = vmatprep.subr.mxu0 0.0
        %1277 = vmatpush1.msra.mxu0 0.0
        %1278 = vmatprep.subr.mxu0 0.0
        %1279 = vmatpush1.msra.mxu0 0.0
        %1280 = vmatprep.subr.mxu0 0.0
        %1281 = vmatpush1.msra.mxu0 0.0
        %1282 = vmatprep.mubr.f32.mxu0 0.0
        %1283 = vmatmul.mubr.f32.gmra.mrb[0].mxu0 %v1216
        %v1284 = vpop.f32.mrb[0].mxu0
        %v1285 = vadd.f32 0.0, %v1284
        %v1286 = vpop.f32.mrb[0].mxu0
        %1287 = vdwg.mxu0
        %v1289 = vsel %vm883, %v1043, 0
        %1291 = vmatprep.subr.mxu0 0.0
        %1292 = vmatpush1.msra.mxu0 %v879
        %1293 = vmatprep.subr.mxu0 0.0
        %1294 = vmatpush1.msra.mxu0 0.0
        %1295 = vmatprep.subr.mxu0 0.0
        %1296 = vmatpush1.msra.mxu0 0.0
        %1297 = vmatprep.subr.mxu0 0.0
        %1298 = vmatpush1.msra.mxu0 0.0
        %1299 = vmatprep.subr.mxu0 0.0
        %1300 = vmatpush1.msra.mxu0 0.0
        %1301 = vmatprep.subr.mxu0 0.0
        %1302 = vmatpush1.msra.mxu0 0.0
        %1303 = vmatprep.subr.mxu0 0.0
        %1304 = vmatpush1.msra.mxu0 0.0
        %1305 = vmatprep.subr.mxu0 0.0
        %1306 = vmatpush1.msra.mxu0 0.0
        %1307 = vmatprep.subr.mxu0 0.0
        %1308 = vmatpush1.msra.mxu0 0.0
        %1309 = vmatprep.subr.mxu0 0.0
        %1310 = vmatpush1.msra.mxu0 0.0
        %1311 = vmatprep.subr.mxu0 0.0
        %1312 = vmatpush1.msra.mxu0 0.0
        %1313 = vmatprep.subr.mxu0 0.0
        %1314 = vmatpush1.msra.mxu0 0.0
        %1315 = vmatprep.subr.mxu0 0.0
        %1316 = vmatpush1.msra.mxu0 0.0
        %1317 = vmatprep.subr.mxu0 0.0
        %1318 = vmatpush1.msra.mxu0 0.0
        %1319 = vmatprep.subr.mxu0 0.0
        %1320 = vmatpush1.msra.mxu0 0.0
        %1321 = vmatprep.subr.mxu0 0.0
        %1322 = vmatpush1.msra.mxu0 0.0
        %1323 = vmatprep.subr.mxu0 0.0
        %1324 = vmatpush1.msra.mxu0 0.0
        %1325 = vmatprep.subr.mxu0 0.0
        %1326 = vmatpush1.msra.mxu0 0.0
        %1327 = vmatprep.subr.mxu0 0.0
        %1328 = vmatpush1.msra.mxu0 0.0
        %1329 = vmatprep.subr.mxu0 0.0
        %1330 = vmatpush1.msra.mxu0 0.0
        %1331 = vmatprep.subr.mxu0 0.0
        %1332 = vmatpush1.msra.mxu0 0.0
        %1333 = vmatprep.subr.mxu0 0.0
        %1334 = vmatpush1.msra.mxu0 0.0
        %1335 = vmatprep.subr.mxu0 0.0
        %1336 = vmatpush1.msra.mxu0 0.0
        %1337 = vmatprep.subr.mxu0 0.0
        %1338 = vmatpush1.msra.mxu0 0.0
        %1339 = vmatprep.subr.mxu0 0.0
        %1340 = vmatpush1.msra.mxu0 0.0
        %1341 = vmatprep.subr.mxu0 0.0
        %1342 = vmatpush1.msra.mxu0 0.0
        %1343 = vmatprep.subr.mxu0 0.0
        %1344 = vmatpush1.msra.mxu0 0.0
        %1345 = vmatprep.subr.mxu0 0.0
        %1346 = vmatpush1.msra.mxu0 0.0
        %1347 = vmatprep.subr.mxu0 0.0
        %1348 = vmatpush1.msra.mxu0 0.0
        %1349 = vmatprep.subr.mxu0 0.0
        %1350 = vmatpush1.msra.mxu0 0.0
        %1351 = vmatprep.subr.mxu0 0.0
        %1352 = vmatpush1.msra.mxu0 0.0
        %1353 = vmatprep.subr.mxu0 0.0
        %1354 = vmatpush1.msra.mxu0 0.0
        %1355 = vmatprep.mubr.f32.mxu0 0.0
        %1356 = vmatmul.mubr.f32.gmra.mrb[0].mxu0 %v1289
        %v1357 = vpop.f32.mrb[0].mxu0
        %v1358 = vadd.f32 %v1285, %v1357
        %v1359 = vpop.f32.mrb[0].mxu0
        %1360 = vdwg.mxu0
        %1361 = vrot.lane.b32.xlu0 %v714, 112
        %v1362 = vpop.permute.xlu0 %1361
        %1363 = vrot.lane.b32.xlu0 %v795, 112
        %v1364 = vpop.permute.xlu0 %1363
        %v1365 = vsel %vm883, %v1362, 0
        %v1367 = vsel %vm883, %v1364, 0
        %1369 = vmatprep.subr.mxu0 0.0
        %1370 = vmatpush1.xpose.msra.mxu0 %v1367
        %1371 = vmatprep.subr.mxu0 0.0
        %1372 = vmatpush1.xpose.msra.mxu0 0.0
        %1373 = vmatprep.subr.mxu0 0.0
        %1374 = vmatpush1.xpose.msra.mxu0 0.0
        %1375 = vmatprep.subr.mxu0 0.0
        %1376 = vmatpush1.xpose.msra.mxu0 0.0
        %1377 = vmatprep.subr.mxu0 0.0
        %1378 = vmatpush1.xpose.msra.mxu0 0.0
        %1379 = vmatprep.subr.mxu0 0.0
        %1380 = vmatpush1.xpose.msra.mxu0 0.0
        %1381 = vmatprep.subr.mxu0 0.0
        %1382 = vmatpush1.xpose.msra.mxu0 0.0
        %1383 = vmatprep.subr.mxu0 0.0
        %1384 = vmatpush1.xpose.msra.mxu0 0.0
        %1385 = vmatprep.subr.mxu0 0.0
        %1386 = vmatpush1.xpose.msra.mxu0 0.0
        %1387 = vmatprep.subr.mxu0 0.0
        %1388 = vmatpush1.xpose.msra.mxu0 0.0
        %1389 = vmatprep.subr.mxu0 0.0
        %1390 = vmatpush1.xpose.msra.mxu0 0.0
        %1391 = vmatprep.subr.mxu0 0.0
        %1392 = vmatpush1.xpose.msra.mxu0 0.0
        %1393 = vmatprep.subr.mxu0 0.0
        %1394 = vmatpush1.xpose.msra.mxu0 0.0
        %1395 = vmatprep.subr.mxu0 0.0
        %1396 = vmatpush1.xpose.msra.mxu0 0.0
        %1397 = vmatprep.subr.mxu0 0.0
        %1398 = vmatpush1.xpose.msra.mxu0 0.0
        %1399 = vmatprep.subr.mxu0 0.0
        %1400 = vmatpush1.xpose.msra.mxu0 0.0
        %1401 = vmatprep.subr.mxu0 0.0
        %1402 = vmatpush1.xpose.msra.mxu0 0.0
        %1403 = vmatprep.subr.mxu0 0.0
        %1404 = vmatpush1.xpose.msra.mxu0 0.0
        %1405 = vmatprep.subr.mxu0 0.0
        %1406 = vmatpush1.xpose.msra.mxu0 0.0
        %1407 = vmatprep.subr.mxu0 0.0
        %1408 = vmatpush1.xpose.msra.mxu0 0.0
        %1409 = vmatprep.subr.mxu0 0.0
        %1410 = vmatpush1.xpose.msra.mxu0 0.0
        %1411 = vmatprep.subr.mxu0 0.0
        %1412 = vmatpush1.xpose.msra.mxu0 0.0
        %1413 = vmatprep.subr.mxu0 0.0
        %1414 = vmatpush1.xpose.msra.mxu0 0.0
        %1415 = vmatprep.subr.mxu0 0.0
        %1416 = vmatpush1.xpose.msra.mxu0 0.0
        %1417 = vmatprep.subr.mxu0 0.0
        %1418 = vmatpush1.xpose.msra.mxu0 0.0
        %1419 = vmatprep.subr.mxu0 0.0
        %1420 = vmatpush1.xpose.msra.mxu0 0.0
        %1421 = vmatprep.subr.mxu0 0.0
        %1422 = vmatpush1.xpose.msra.mxu0 0.0
        %1423 = vmatprep.subr.mxu0 0.0
        %1424 = vmatpush1.xpose.msra.mxu0 0.0
        %1425 = vmatprep.subr.mxu0 0.0
        %1426 = vmatpush1.xpose.msra.mxu0 0.0
        %1427 = vmatprep.subr.mxu0 0.0
        %1428 = vmatpush1.xpose.msra.mxu0 0.0
        %1429 = vmatprep.subr.mxu0 0.0
        %1430 = vmatpush1.xpose.msra.mxu0 0.0
        %1431 = vmatprep.subr.mxu0 0.0
        %1432 = vmatpush1.xpose.msra.mxu0 0.0
        %1433 = vmatprep.mubr.f32.mxu0 0.0
        %1434 = vmatmul.mubr.f32.gmra.mrb[0].mxu0 %v1365
        %v1435 = vpop.f32.mrb[0].mxu0
        %v1436 = vadd.f32 0.0, %v1435
        %v1437 = vpop.f32.mrb[0].mxu0
        %1438 = vdwg.mxu0
        %v1439 = vmul.f32 %v1436, 0.35355338
        %v1440 = vsel %vm883, %v1439, -inf
        %1441 = vmax.xlane.f32.xlu0 %v1440
        %v1442 = vpop.xlane.xlu0 %1441
        %v1443 = vsub.f32 %v1439, %v1442
        %v1444 = vmul.f32 %v1443, 1.442695
        %v1445 = vpow.pop %v1444
        %v1446 = vsel %vm883, %v1445, 0.0
        %1447 = vadd.xlane.f32.xlu0 %v1446
        %v1448 = vpop.xlane.xlu0 %1447
        %v1449 = vrcp.pop %v1448
        %v1450 = vmul.f32 %v1445, %v1449
        %s1451 = scalar_lea.vmem %s630, 16 [#allocation9]
        %1452 = vst.msk [vmem:[%s1451] sm:$0xff] %vm883, %v1450
        %1453 = vrot.lane.b32.xlu0 %v876, 112
        %v1454 = vpop.permute.xlu0 %1453
        %v1457 = vsel %vm883, %v1450, 0
        %1459 = vmatprep.subr.mxu0 0.0
        %1460 = vmatpush1.msra.mxu0 %v1454
        %1461 = vmatprep.subr.mxu0 0.0
        %1462 = vmatpush1.msra.mxu0 0.0
        %1463 = vmatprep.subr.mxu0 0.0
        %1464 = vmatpush1.msra.mxu0 0.0
        %1465 = vmatprep.subr.mxu0 0.0
        %1466 = vmatpush1.msra.mxu0 0.0
        %1467 = vmatprep.subr.mxu0 0.0
        %1468 = vmatpush1.msra.mxu0 0.0
        %1469 = vmatprep.subr.mxu0 0.0
        %1470 = vmatpush1.msra.mxu0 0.0
        %1471 = vmatprep.subr.mxu0 0.0
        %1472 = vmatpush1.msra.mxu0 0.0
        %1473 = vmatprep.subr.mxu0 0.0
        %1474 = vmatpush1.msra.mxu0 0.0
        %1475 = vmatprep.subr.mxu0 0.0
        %1476 = vmatpush1.msra.mxu0 0.0
        %1477 = vmatprep.subr.mxu0 0.0
        %1478 = vmatpush1.msra.mxu0 0.0
        %1479 = vmatprep.subr.mxu0 0.0
        %1480 = vmatpush1.msra.mxu0 0.0
        %1481 = vmatprep.subr.mxu0 0.0
        %1482 = vmatpush1.msra.mxu0 0.0
        %1483 = vmatprep.subr.mxu0 0.0
        %1484 = vmatpush1.msra.mxu0 0.0
        %1485 = vmatprep.subr.mxu0 0.0
        %1486 = vmatpush1.msra.mxu0 0.0
        %1487 = vmatprep.subr.mxu0 0.0
        %1488 = vmatpush1.msra.mxu0 0.0
        %1489 = vmatprep.subr.mxu0 0.0
        %1490 = vmatpush1.msra.mxu0 0.0
        %1491 = vmatprep.subr.mxu0 0.0
        %1492 = vmatpush1.msra.mxu0 0.0
        %1493 = vmatprep.subr.mxu0 0.0
        %1494 = vmatpush1.msra.mxu0 0.0
        %1495 = vmatprep.subr.mxu0 0.0
        %1496 = vmatpush1.msra.mxu0 0.0
        %1497 = vmatprep.subr.mxu0 0.0
        %1498 = vmatpush1.msra.mxu0 0.0
        %1499 = vmatprep.subr.mxu0 0.0
        %1500 = vmatpush1.msra.mxu0 0.0
        %1501 = vmatprep.subr.mxu0 0.0
        %1502 = vmatpush1.msra.mxu0 0.0
        %1503 = vmatprep.subr.mxu0 0.0
        %1504 = vmatpush1.msra.mxu0 0.0
        %1505 = vmatprep.subr.mxu0 0.0
        %1506 = vmatpush1.msra.mxu0 0.0
        %1507 = vmatprep.subr.mxu0 0.0
        %1508 = vmatpush1.msra.mxu0 0.0
        %1509 = vmatprep.subr.mxu0 0.0
        %1510 = vmatpush1.msra.mxu0 0.0
        %1511 = vmatprep.subr.mxu0 0.0
        %1512 = vmatpush1.msra.mxu0 0.0
        %1513 = vmatprep.subr.mxu0 0.0
        %1514 = vmatpush1.msra.mxu0 0.0
        %1515 = vmatprep.subr.mxu0 0.0
        %1516 = vmatpush1.msra.mxu0 0.0
        %1517 = vmatprep.subr.mxu0 0.0
        %1518 = vmatpush1.msra.mxu0 0.0
        %1519 = vmatprep.subr.mxu0 0.0
        %1520 = vmatpush1.msra.mxu0 0.0
        %1521 = vmatprep.subr.mxu0 0.0
        %1522 = vmatpush1.msra.mxu0 0.0
        %1523 = vmatprep.mubr.f32.mxu0 0.0
        %1524 = vmatmul.mubr.f32.gmra.mrb[0].mxu0 %v1457
        %v1525 = vpop.f32.mrb[0].mxu0
        %v1526 = vadd.f32 0.0, %v1525
        %v1527 = vpop.f32.mrb[0].mxu0
        %1528 = vdwg.mxu0
        %v1530 = vsel %vm883, %v1526, 0
        %1532 = vmatprep.subr.mxu0 0.0
        %1533 = vmatpush1.msra.mxu0 %v881
        %1534 = vmatprep.subr.mxu0 0.0
        %1535 = vmatpush1.msra.mxu0 0.0
        %1536 = vmatprep.subr.mxu0 0.0
        %1537 = vmatpush1.msra.mxu0 0.0
        %1538 = vmatprep.subr.mxu0 0.0
        %1539 = vmatpush1.msra.mxu0 0.0
        %1540 = vmatprep.subr.mxu0 0.0
        %1541 = vmatpush1.msra.mxu0 0.0
        %1542 = vmatprep.subr.mxu0 0.0
        %1543 = vmatpush1.msra.mxu0 0.0
        %1544 = vmatprep.subr.mxu0 0.0
        %1545 = vmatpush1.msra.mxu0 0.0
        %1546 = vmatprep.subr.mxu0 0.0
        %1547 = vmatpush1.msra.mxu0 0.0
        %1548 = vmatprep.subr.mxu0 0.0
        %1549 = vmatpush1.msra.mxu0 0.0
        %1550 = vmatprep.subr.mxu0 0.0
        %1551 = vmatpush1.msra.mxu0 0.0
        %1552 = vmatprep.subr.mxu0 0.0
        %1553 = vmatpush1.msra.mxu0 0.0
        %1554 = vmatprep.subr.mxu0 0.0
        %1555 = vmatpush1.msra.mxu0 0.0
        %1556 = vmatprep.subr.mxu0 0.0
        %1557 = vmatpush1.msra.mxu0 0.0
        %1558 = vmatprep.subr.mxu0 0.0
        %1559 = vmatpush1.msra.mxu0 0.0
        %1560 = vmatprep.subr.mxu0 0.0
        %1561 = vmatpush1.msra.mxu0 0.0
        %1562 = vmatprep.subr.mxu0 0.0
        %1563 = vmatpush1.msra.mxu0 0.0
        %1564 = vmatprep.subr.mxu0 0.0
        %1565 = vmatpush1.msra.mxu0 0.0
        %1566 = vmatprep.subr.mxu0 0.0
        %1567 = vmatpush1.msra.mxu0 0.0
        %1568 = vmatprep.subr.mxu0 0.0
        %1569 = vmatpush1.msra.mxu0 0.0
        %1570 = vmatprep.subr.mxu0 0.0
        %1571 = vmatpush1.msra.mxu0 0.0
        %1572 = vmatprep.subr.mxu0 0.0
        %1573 = vmatpush1.msra.mxu0 0.0
        %1574 = vmatprep.subr.mxu0 0.0
        %1575 = vmatpush1.msra.mxu0 0.0
        %1576 = vmatprep.subr.mxu0 0.0
        %1577 = vmatpush1.msra.mxu0 0.0
        %1578 = vmatprep.subr.mxu0 0.0
        %1579 = vmatpush1.msra.mxu0 0.0
        %1580 = vmatprep.subr.mxu0 0.0
        %1581 = vmatpush1.msra.mxu0 0.0
        %1582 = vmatprep.subr.mxu0 0.0
        %1583 = vmatpush1.msra.mxu0 0.0
        %1584 = vmatprep.subr.mxu0 0.0
        %1585 = vmatpush1.msra.mxu0 0.0
        %1586 = vmatprep.subr.mxu0 0.0
        %1587 = vmatpush1.msra.mxu0 0.0
        %1588 = vmatprep.subr.mxu0 0.0
        %1589 = vmatpush1.msra.mxu0 0.0
        %1590 = vmatprep.subr.mxu0 0.0
        %1591 = vmatpush1.msra.mxu0 0.0
        %1592 = vmatprep.subr.mxu0 0.0
        %1593 = vmatpush1.msra.mxu0 0.0
        %1594 = vmatprep.subr.mxu0 0.0
        %1595 = vmatpush1.msra.mxu0 0.0
        %1596 = vmatprep.mubr.f32.mxu0 0.0
        %1597 = vmatmul.mubr.f32.gmra.mrb[0].mxu0 %v1530
        %v1598 = vpop.f32.mrb[0].mxu0
        %v1599 = vadd.f32 0.0, %v1598
        %v1600 = vpop.f32.mrb[0].mxu0
        %1601 = vdwg.mxu0
        %v1602 = vadd.f32 %v1358, %v1599
        %1603 = vrot.lane.b32.xlu0 %v714, 104
        %v1604 = vpop.permute.xlu0 %1603
        %1605 = vrot.lane.b32.xlu0 %v795, 104
        %v1606 = vpop.permute.xlu0 %1605
        %v1607 = vsel %vm883, %v1604, 0
        %v1609 = vsel %vm883, %v1606, 0
        %1611 = vmatprep.subr.mxu0 0.0
        %1612 = vmatpush1.xpose.msra.mxu0 %v1609
        %1613 = vmatprep.subr.mxu0 0.0
        %1614 = vmatpush1.xpose.msra.mxu0 0.0
        %1615 = vmatprep.subr.mxu0 0.0
        %1616 = vmatpush1.xpose.msra.mxu0 0.0
        %1617 = vmatprep.subr.mxu0 0.0
        %1618 = vmatpush1.xpose.msra.mxu0 0.0
        %1619 = vmatprep.subr.mxu0 0.0
        %1620 = vmatpush1.xpose.msra.mxu0 0.0
        %1621 = vmatprep.subr.mxu0 0.0
        %1622 = vmatpush1.xpose.msra.mxu0 0.0
        %1623 = vmatprep.subr.mxu0 0.0
        %1624 = vmatpush1.xpose.msra.mxu0 0.0
        %1625 = vmatprep.subr.mxu0 0.0
        %1626 = vmatpush1.xpose.msra.mxu0 0.0
        %1627 = vmatprep.subr.mxu0 0.0
        %1628 = vmatpush1.xpose.msra.mxu0 0.0
        %1629 = vmatprep.subr.mxu0 0.0
        %1630 = vmatpush1.xpose.msra.mxu0 0.0
        %1631 = vmatprep.subr.mxu0 0.0
        %1632 = vmatpush1.xpose.msra.mxu0 0.0
        %1633 = vmatprep.subr.mxu0 0.0
        %1634 = vmatpush1.xpose.msra.mxu0 0.0
        %1635 = vmatprep.subr.mxu0 0.0
        %1636 = vmatpush1.xpose.msra.mxu0 0.0
        %1637 = vmatprep.subr.mxu0 0.0
        %1638 = vmatpush1.xpose.msra.mxu0 0.0
        %1639 = vmatprep.subr.mxu0 0.0
        %1640 = vmatpush1.xpose.msra.mxu0 0.0
        %1641 = vmatprep.subr.mxu0 0.0
        %1642 = vmatpush1.xpose.msra.mxu0 0.0
        %1643 = vmatprep.subr.mxu0 0.0
        %1644 = vmatpush1.xpose.msra.mxu0 0.0
        %1645 = vmatprep.subr.mxu0 0.0
        %1646 = vmatpush1.xpose.msra.mxu0 0.0
        %1647 = vmatprep.subr.mxu0 0.0
        %1648 = vmatpush1.xpose.msra.mxu0 0.0
        %1649 = vmatprep.subr.mxu0 0.0
        %1650 = vmatpush1.xpose.msra.mxu0 0.0
        %1651 = vmatprep.subr.mxu0 0.0
        %1652 = vmatpush1.xpose.msra.mxu0 0.0
        %1653 = vmatprep.subr.mxu0 0.0
        %1654 = vmatpush1.xpose.msra.mxu0 0.0
        %1655 = vmatprep.subr.mxu0 0.0
        %1656 = vmatpush1.xpose.msra.mxu0 0.0
        %1657 = vmatprep.subr.mxu0 0.0
        %1658 = vmatpush1.xpose.msra.mxu0 0.0
        %1659 = vmatprep.subr.mxu0 0.0
        %1660 = vmatpush1.xpose.msra.mxu0 0.0
        %1661 = vmatprep.subr.mxu0 0.0
        %1662 = vmatpush1.xpose.msra.mxu0 0.0
        %1663 = vmatprep.subr.mxu0 0.0
        %1664 = vmatpush1.xpose.msra.mxu0 0.0
        %1665 = vmatprep.subr.mxu0 0.0
        %1666 = vmatpush1.xpose.msra.mxu0 0.0
        %1667 = vmatprep.subr.mxu0 0.0
        %1668 = vmatpush1.xpose.msra.mxu0 0.0
        %1669 = vmatprep.subr.mxu0 0.0
        %1670 = vmatpush1.xpose.msra.mxu0 0.0
        %1671 = vmatprep.subr.mxu0 0.0
        %1672 = vmatpush1.xpose.msra.mxu0 0.0
        %1673 = vmatprep.subr.mxu0 0.0
        %1674 = vmatpush1.xpose.msra.mxu0 0.0
        %1675 = vmatprep.mubr.f32.mxu0 0.0
        %1676 = vmatmul.mubr.f32.gmra.mrb[0].mxu0 %v1607
        %v1677 = vpop.f32.mrb[0].mxu0
        %v1678 = vadd.f32 0.0, %v1677
        %v1679 = vpop.f32.mrb[0].mxu0
        %1680 = vdwg.mxu0
        %v1681 = vmul.f32 %v1678, 0.35355338
        %v1682 = vsel %vm883, %v1681, -inf
        %1683 = vmax.xlane.f32.xlu0 %v1682
        %v1684 = vpop.xlane.xlu0 %1683
        %v1685 = vsub.f32 %v1681, %v1684
        %v1686 = vmul.f32 %v1685, 1.442695
        %v1687 = vpow.pop %v1686
        %v1688 = vsel %vm883, %v1687, 0.0
        %1689 = vadd.xlane.f32.xlu0 %v1688
        %v1690 = vpop.xlane.xlu0 %1689
        %v1691 = vrcp.pop %v1690
        %v1692 = vmul.f32 %v1687, %v1691
        %s1693 = scalar_lea.vmem %s630, 24 [#allocation9]
        %1694 = vst.msk [vmem:[%s1693] sm:$0xff] %vm883, %v1692
        %1695 = vrot.lane.b32.xlu0 %v876, 104
        %v1696 = vpop.permute.xlu0 %1695
        %v1699 = vsel %vm883, %v1692, 0
        %1701 = vmatprep.subr.mxu0 0.0
        %1702 = vmatpush1.msra.mxu0 %v1696
        %1703 = vmatprep.subr.mxu0 0.0
        %1704 = vmatpush1.msra.mxu0 0.0
        %1705 = vmatprep.subr.mxu0 0.0
        %1706 = vmatpush1.msra.mxu0 0.0
        %1707 = vmatprep.subr.mxu0 0.0
        %1708 = vmatpush1.msra.mxu0 0.0
        %1709 = vmatprep.subr.mxu0 0.0
        %1710 = vmatpush1.msra.mxu0 0.0
        %1711 = vmatprep.subr.mxu0 0.0
        %1712 = vmatpush1.msra.mxu0 0.0
        %1713 = vmatprep.subr.mxu0 0.0
        %1714 = vmatpush1.msra.mxu0 0.0
        %1715 = vmatprep.subr.mxu0 0.0
        %1716 = vmatpush1.msra.mxu0 0.0
        %1717 = vmatprep.subr.mxu0 0.0
        %1718 = vmatpush1.msra.mxu0 0.0
        %1719 = vmatprep.subr.mxu0 0.0
        %1720 = vmatpush1.msra.mxu0 0.0
        %1721 = vmatprep.subr.mxu0 0.0
        %1722 = vmatpush1.msra.mxu0 0.0
        %1723 = vmatprep.subr.mxu0 0.0
        %1724 = vmatpush1.msra.mxu0 0.0
        %1725 = vmatprep.subr.mxu0 0.0
        %1726 = vmatpush1.msra.mxu0 0.0
        %1727 = vmatprep.subr.mxu0 0.0
        %1728 = vmatpush1.msra.mxu0 0.0
        %1729 = vmatprep.subr.mxu0 0.0
        %1730 = vmatpush1.msra.mxu0 0.0
        %1731 = vmatprep.subr.mxu0 0.0
        %1732 = vmatpush1.msra.mxu0 0.0
        %1733 = vmatprep.subr.mxu0 0.0
        %1734 = vmatpush1.msra.mxu0 0.0
        %1735 = vmatprep.subr.mxu0 0.0
        %1736 = vmatpush1.msra.mxu0 0.0
        %1737 = vmatprep.subr.mxu0 0.0
        %1738 = vmatpush1.msra.mxu0 0.0
        %1739 = vmatprep.subr.mxu0 0.0
        %1740 = vmatpush1.msra.mxu0 0.0
        %1741 = vmatprep.subr.mxu0 0.0
        %1742 = vmatpush1.msra.mxu0 0.0
        %1743 = vmatprep.subr.mxu0 0.0
        %1744 = vmatpush1.msra.mxu0 0.0
        %1745 = vmatprep.subr.mxu0 0.0
        %1746 = vmatpush1.msra.mxu0 0.0
        %1747 = vmatprep.subr.mxu0 0.0
        %1748 = vmatpush1.msra.mxu0 0.0
        %1749 = vmatprep.subr.mxu0 0.0
        %1750 = vmatpush1.msra.mxu0 0.0
        %1751 = vmatprep.subr.mxu0 0.0
        %1752 = vmatpush1.msra.mxu0 0.0
        %1753 = vmatprep.subr.mxu0 0.0
        %1754 = vmatpush1.msra.mxu0 0.0
        %1755 = vmatprep.subr.mxu0 0.0
        %1756 = vmatpush1.msra.mxu0 0.0
        %1757 = vmatprep.subr.mxu0 0.0
        %1758 = vmatpush1.msra.mxu0 0.0
        %1759 = vmatprep.subr.mxu0 0.0
        %1760 = vmatpush1.msra.mxu0 0.0
        %1761 = vmatprep.subr.mxu0 0.0
        %1762 = vmatpush1.msra.mxu0 0.0
        %1763 = vmatprep.subr.mxu0 0.0
        %1764 = vmatpush1.msra.mxu0 0.0
        %1765 = vmatprep.mubr.f32.mxu0 0.0
        %1766 = vmatmul.mubr.f32.gmra.mrb[0].mxu0 %v1699
        %v1767 = vpop.f32.mrb[0].mxu0
        %v1768 = vadd.f32 0.0, %v1767
        %v1769 = vpop.f32.mrb[0].mxu0
        %1770 = vdwg.mxu0
        %v1772 = vsel %vm883, %v1768, 0
        %1774 = vmatprep.subr.mxu0 0.0
        %1775 = vmatpush1.msra.mxu0 %v882
        %1776 = vmatprep.subr.mxu0 0.0
        %1777 = vmatpush1.msra.mxu0 0.0
        %1778 = vmatprep.subr.mxu0 0.0
        %1779 = vmatpush1.msra.mxu0 0.0
        %1780 = vmatprep.subr.mxu0 0.0
        %1781 = vmatpush1.msra.mxu0 0.0
        %1782 = vmatprep.subr.mxu0 0.0
        %1783 = vmatpush1.msra.mxu0 0.0
        %1784 = vmatprep.subr.mxu0 0.0
        %1785 = vmatpush1.msra.mxu0 0.0
        %1786 = vmatprep.subr.mxu0 0.0
        %1787 = vmatpush1.msra.mxu0 0.0
        %1788 = vmatprep.subr.mxu0 0.0
        %1789 = vmatpush1.msra.mxu0 0.0
        %1790 = vmatprep.subr.mxu0 0.0
        %1791 = vmatpush1.msra.mxu0 0.0
        %1792 = vmatprep.subr.mxu0 0.0
        %1793 = vmatpush1.msra.mxu0 0.0
        %1794 = vmatprep.subr.mxu0 0.0
        %1795 = vmatpush1.msra.mxu0 0.0
        %1796 = vmatprep.subr.mxu0 0.0
        %1797 = vmatpush1.msra.mxu0 0.0
        %1798 = vmatprep.subr.mxu0 0.0
        %1799 = vmatpush1.msra.mxu0 0.0
        %1800 = vmatprep.subr.mxu0 0.0
        %1801 = vmatpush1.msra.mxu0 0.0
        %1802 = vmatprep.subr.mxu0 0.0
        %1803 = vmatpush1.msra.mxu0 0.0
        %1804 = vmatprep.subr.mxu0 0.0
        %1805 = vmatpush1.msra.mxu0 0.0
        %1806 = vmatprep.subr.mxu0 0.0
        %1807 = vmatpush1.msra.mxu0 0.0
        %1808 = vmatprep.subr.mxu0 0.0
        %1809 = vmatpush1.msra.mxu0 0.0
        %1810 = vmatprep.subr.mxu0 0.0
        %1811 = vmatpush1.msra.mxu0 0.0
        %1812 = vmatprep.subr.mxu0 0.0
        %1813 = vmatpush1.msra.mxu0 0.0
        %1814 = vmatprep.subr.mxu0 0.0
        %1815 = vmatpush1.msra.mxu0 0.0
        %1816 = vmatprep.subr.mxu0 0.0
        %1817 = vmatpush1.msra.mxu0 0.0
        %1818 = vmatprep.subr.mxu0 0.0
        %1819 = vmatpush1.msra.mxu0 0.0
        %1820 = vmatprep.subr.mxu0 0.0
        %1821 = vmatpush1.msra.mxu0 0.0
        %1822 = vmatprep.subr.mxu0 0.0
        %1823 = vmatpush1.msra.mxu0 0.0
        %1824 = vmatprep.subr.mxu0 0.0
        %1825 = vmatpush1.msra.mxu0 0.0
        %1826 = vmatprep.subr.mxu0 0.0
        %1827 = vmatpush1.msra.mxu0 0.0
        %1828 = vmatprep.subr.mxu0 0.0
        %1829 = vmatpush1.msra.mxu0 0.0
        %1830 = vmatprep.subr.mxu0 0.0
        %1831 = vmatpush1.msra.mxu0 0.0
        %1832 = vmatprep.subr.mxu0 0.0
        %1833 = vmatpush1.msra.mxu0 0.0
        %1834 = vmatprep.subr.mxu0 0.0
        %1835 = vmatpush1.msra.mxu0 0.0
        %1836 = vmatprep.subr.mxu0 0.0
        %1837 = vmatpush1.msra.mxu0 0.0
        %1838 = vmatprep.mubr.f32.mxu0 0.0
        %1839 = vmatmul.mubr.f32.gmra.mrb[0].mxu0 %v1772
        %v1840 = vpop.f32.mrb[0].mxu0
        %v1841 = vadd.f32 0.0, %v1840
        %v1842 = vpop.f32.mrb[0].mxu0
        %1843 = vdwg.mxu0
        %v1844 = vadd.f32 %v1602, %v1841
        %v1845 = vld [vmem:[%s8] sm:$0x1]
        %v1847 = vlaneseq
        %v1848 = vshrl.u32 %v1847, 7
        %v1849 = vsub.s32 0, %v1848
        %v1850 = vrot.slane %v1845, %v1849
        %v1852 = vadd.f32 %v1844, %v1850
        %v1853 = vadd.f32 %v631, %v1852
        %v1854 = vld [vmem:[%s9] sm:$0x1]
        %v1855 = vld [vmem:[%s10] sm:$0x1]
        %v1856 = vsel %vm643, %v1853, 0.0
        %1857 = vadd.xlane.f32.xlu0 %v1856
        %v1858 = vpop.xlane.xlu0 %1857
        %v1859 = vrcp.pop 32.0
        %v1860 = vmul.f32 %v1858, %v1859
        %v1861 = vsub.f32 %v1853, %v1860
        %v1862 = vmul.f32 %v1861, %v1861
        %v1863 = vsel %vm643, %v1862, 0.0
        %1864 = vadd.xlane.f32.xlu0 %v1863
        %v1865 = vpop.xlane.xlu0 %1864
        %v1866 = vmul.f32 %v1865, %v1859
        %v1867 = vadd.f32 %v1866, 1e-05
        %v1868 = vrsqrt.pop %v1867
        %v1869 = vmul.f32 %v1861, %v1868
        %v1871 = vlaneseq
        %v1872 = vshrl.u32 %v1871, 7
        %v1873 = vsub.s32 0, %v1872
        %v1874 = vrot.slane %v1854, %v1873
        %v1876 = vmul.f32 %v1869, %v1874
        %v1878 = vlaneseq
        %v1879 = vshrl.u32 %v1878, 7
        %v1880 = vsub.s32 0, %v1879
        %v1881 = vrot.slane %v1855, %v1880
        %v1883 = vadd.f32 %v1876, %v1881
        %v1884 = vld [vmem:[#allocation7] sm:$0xff]
        %v1885 = vld [vmem:[#allocation7 + $0x8] sm:$0xff]
        %v1886 = vld [vmem:[#allocation7 + $0x10] sm:$0xff]
        %v1887 = vld [vmem:[#allocation7 + $0x18] sm:$0xff]
        %v1888 = vld [vmem:[%s12] sm:$0x1]
        %v1890 = vlaneseq
        %v1891 = vshrl.u32 %v1890, 7
        %v1892 = vsub.s32 0, %v1891
        %v1893 = vrot.slane %v1888, %v1892
        %v1896 = vsel %vm643, %v1883, 0
        %1898 = vmatprep.subr.mxu0 0.0
        %1899 = vmatpush1.msra.mxu0 %v1884
        %1900 = vmatprep.subr.mxu0 0.0
        %1901 = vmatpush1.msra.mxu0 %v1885
        %1902 = vmatprep.subr.mxu0 0.0
        %1903 = vmatpush1.msra.mxu0 %v1886
        %1904 = vmatprep.subr.mxu0 0.0
        %1905 = vmatpush1.msra.mxu0 %v1887
        %1906 = vmatprep.subr.mxu0 0.0
        %1907 = vmatpush1.msra.mxu0 0.0
        %1908 = vmatprep.subr.mxu0 0.0
        %1909 = vmatpush1.msra.mxu0 0.0
        %1910 = vmatprep.subr.mxu0 0.0
        %1911 = vmatpush1.msra.mxu0 0.0
        %1912 = vmatprep.subr.mxu0 0.0
        %1913 = vmatpush1.msra.mxu0 0.0
        %1914 = vmatprep.subr.mxu0 0.0
        %1915 = vmatpush1.msra.mxu0 0.0
        %1916 = vmatprep.subr.mxu0 0.0
        %1917 = vmatpush1.msra.mxu0 0.0
        %1918 = vmatprep.subr.mxu0 0.0
        %1919 = vmatpush1.msra.mxu0 0.0
        %1920 = vmatprep.subr.mxu0 0.0
        %1921 = vmatpush1.msra.mxu0 0.0
        %1922 = vmatprep.subr.mxu0 0.0
        %1923 = vmatpush1.msra.mxu0 0.0
        %1924 = vmatprep.subr.mxu0 0.0
        %1925 = vmatpush1.msra.mxu0 0.0
        %1926 = vmatprep.subr.mxu0 0.0
        %1927 = vmatpush1.msra.mxu0 0.0
        %1928 = vmatprep.subr.mxu0 0.0
        %1929 = vmatpush1.msra.mxu0 0.0
        %1930 = vmatprep.subr.mxu0 0.0
        %1931 = vmatpush1.msra.mxu0 0.0
        %1932 = vmatprep.subr.mxu0 0.0
        %1933 = vmatpush1.msra.mxu0 0.0
        %1934 = vmatprep.subr.mxu0 0.0
        %1935 = vmatpush1.msra.mxu0 0.0
        %1936 = vmatprep.subr.mxu0 0.0
        %1937 = vmatpush1.msra.mxu0 0.0
        %1938 = vmatprep.subr.mxu0 0.0
        %1939 = vmatpush1.msra.mxu0 0.0
        %1940 = vmatprep.subr.mxu0 0.0
        %1941 = vmatpush1.msra.mxu0 0.0
        %1942 = vmatprep.subr.mxu0 0.0
        %1943 = vmatpush1.msra.mxu0 0.0
        %1944 = vmatprep.subr.mxu0 0.0
        %1945 = vmatpush1.msra.mxu0 0.0
        %1946 = vmatprep.subr.mxu0 0.0
        %1947 = vmatpush1.msra.mxu0 0.0
        %1948 = vmatprep.subr.mxu0 0.0
        %1949 = vmatpush1.msra.mxu0 0.0
        %1950 = vmatprep.subr.mxu0 0.0
        %1951 = vmatpush1.msra.mxu0 0.0
        %1952 = vmatprep.subr.mxu0 0.0
        %1953 = vmatpush1.msra.mxu0 0.0
        %1954 = vmatprep.subr.mxu0 0.0
        %1955 = vmatpush1.msra.mxu0 0.0
        %1956 = vmatprep.subr.mxu0 0.0
        %1957 = vmatpush1.msra.mxu0 0.0
        %1958 = vmatprep.subr.mxu0 0.0
        %1959 = vmatpush1.msra.mxu0 0.0
        %1960 = vmatprep.subr.mxu0 0.0
        %1961 = vmatpush1.msra.mxu0 0.0
        %1962 = vmatprep.mubr.f32.mxu0 0.0
        %1963 = vmatmul.mubr.f32.gmra.mrb[0].mxu0 %v1896
        %v1964 = vpop.f32.mrb[0].mxu0
        %v1965 = vadd.f32 %v1893, %v1964
        %v1966 = vpop.f32.mrb[0].mxu0
        %1967 = vdwg.mxu0
        %v1968 = vmax.f32 %v1965, 0.0
        %v1969 = vld [vmem:[%s13] sm:$0xff]
        %v1970 = vld [vmem:[%s13 + $0x8] sm:$0xff]
        %v1971 = vld [vmem:[%s13 + $0x10] sm:$0xff]
        %v1972 = vld [vmem:[%s13 + $0x18] sm:$0xff]
        %v1973 = vld [vmem:[%s13 + $0x20] sm:$0xff]
        %v1974 = vld [vmem:[%s13 + $0x28] sm:$0xff]
        %v1975 = vld [vmem:[%s13 + $0x30] sm:$0xff]
        %v1976 = vld [vmem:[%s13 + $0x38] sm:$0xff]
        %v1977 = vld [vmem:[%s14] sm:$0x1]
        %v1979 = vlaneseq
        %v1980 = vshrl.u32 %v1979, 7
        %v1981 = vsub.s32 0, %v1980
        %v1982 = vrot.slane %v1977, %v1981
        %vm1984 = vcmask 523264
        %v1986 = vsel %vm1984, %v1968, 0
        %1988 = vmatprep.subr.mxu0 0.0
        %1989 = vmatpush1.msra.mxu0 %v1969
        %1990 = vmatprep.subr.mxu0 0.0
        %1991 = vmatpush1.msra.mxu0 %v1970
        %1992 = vmatprep.subr.mxu0 0.0
        %1993 = vmatpush1.msra.mxu0 %v1971
        %1994 = vmatprep.subr.mxu0 0.0
        %1995 = vmatpush1.msra.mxu0 %v1972
        %1996 = vmatprep.subr.mxu0 0.0
        %1997 = vmatpush1.msra.mxu0 %v1973
        %1998 = vmatprep.subr.mxu0 0.0
        %1999 = vmatpush1.msra.mxu0 %v1974
        %2000 = vmatprep.subr.mxu0 0.0
        %2001 = vmatpush1.msra.mxu0 %v1975
        %2002 = vmatprep.subr.mxu0 0.0
        %2003 = vmatpush1.msra.mxu0 %v1976
        %2004 = vmatprep.subr.mxu0 0.0
        %2005 = vmatpush1.msra.mxu0 0.0
        %2006 = vmatprep.subr.mxu0 0.0
        %2007 = vmatpush1.msra.mxu0 0.0
        %2008 = vmatprep.subr.mxu0 0.0
        %2009 = vmatpush1.msra.mxu0 0.0
        %2010 = vmatprep.subr.mxu0 0.0
        %2011 = vmatpush1.msra.mxu0 0.0
        %2012 = vmatprep.subr.mxu0 0.0
        %2013 = vmatpush1.msra.mxu0 0.0
        %2014 = vmatprep.subr.mxu0 0.0
        %2015 = vmatpush1.msra.mxu0 0.0
        %2016 = vmatprep.subr.mxu0 0.0
        %2017 = vmatpush1.msra.mxu0 0.0
        %2018 = vmatprep.subr.mxu0 0.0
        %2019 = vmatpush1.msra.mxu0 0.0
        %2020 = vmatprep.subr.mxu0 0.0
        %2021 = vmatpush1.msra.mxu0 0.0
        %2022 = vmatprep.subr.mxu0 0.0
        %2023 = vmatpush1.msra.mxu0 0.0
        %2024 = vmatprep.subr.mxu0 0.0
        %2025 = vmatpush1.msra.mxu0 0.0
        %2026 = vmatprep.subr.mxu0 0.0
        %2027 = vmatpush1.msra.mxu0 0.0
        %2028 = vmatprep.subr.mxu0 0.0
        %2029 = vmatpush1.msra.mxu0 0.0
        %2030 = vmatprep.subr.mxu0 0.0
        %2031 = vmatpush1.msra.mxu0 0.0
        %2032 = vmatprep.subr.mxu0 0.0
        %2033 = vmatpush1.msra.mxu0 0.0
        %2034 = vmatprep.subr.mxu0 0.0
        %2035 = vmatpush1.msra.mxu0 0.0
        %2036 = vmatprep.subr.mxu0 0.0
        %2037 = vmatpush1.msra.mxu0 0.0
        %2038 = vmatprep.subr.mxu0 0.0
        %2039 = vmatpush1.msra.mxu0 0.0
        %2040 = vmatprep.subr.mxu0 0.0
        %2041 = vmatpush1.msra.mxu0 0.0
        %2042 = vmatprep.subr.mxu0 0.0
        %2043 = vmatpush1.msra.mxu0 0.0
        %2044 = vmatprep.subr.mxu0 0.0
        %2045 = vmatpush1.msra.mxu0 0.0
        %2046 = vmatprep.subr.mxu0 0.0
        %2047 = vmatpush1.msra.mxu0 0.0
        %2048 = vmatprep.subr.mxu0 0.0
        %2049 = vmatpush1.msra.mxu0 0.0
        %2050 = vmatprep.subr.mxu0 0.0
        %2051 = vmatpush1.msra.mxu0 0.0
        %2052 = vmatprep.mubr.f32.mxu0 0.0
        %2053 = vmatmul.mubr.f32.gmra.mrb[0].mxu0 %v1986
        %v2054 = vpop.f32.mrb[0].mxu0
        %v2055 = vadd.f32 %v1982, %v2054
        %v2056 = vpop.f32.mrb[0].mxu0
        %2057 = vdwg.mxu0
        %v2058 = vadd.f32 %v1883, %v2055
        %v2059 = vld [vmem:[%s15] sm:$0x1]
        %v2060 = vld [vmem:[%s16] sm:$0x1]
        %v2061 = vsel %vm643, %v2058, 0.0
        %2062 = vadd.xlane.f32.xlu0 %v2061
        %v2063 = vpop.xlane.xlu0 %2062
        %v2064 = vmul.f32 %v2063, %v1859
        %v2065 = vsub.f32 %v2058, %v2064
        %v2066 = vmul.f32 %v2065, %v2065
        %v2067 = vsel %vm643, %v2066, 0.0
        %2068 = vadd.xlane.f32.xlu0 %v2067
        %v2069 = vpop.xlane.xlu0 %2068
        %v2070 = vmul.f32 %v2069, %v1859
        %v2071 = vadd.f32 %v2070, 1e-05
        %v2072 = vrsqrt.pop %v2071
        %v2073 = vmul.f32 %v2065, %v2072
        %v2075 = vlaneseq
        %v2076 = vshrl.u32 %v2075, 7
        %v2077 = vsub.s32 0, %v2076
        %v2078 = vrot.slane %v2059, %v2077
        %v2080 = vmul.f32 %v2073, %v2078
        %v2082 = vlaneseq
        %v2083 = vshrl.u32 %v2082, 7
        %v2084 = vsub.s32 0, %v2083
        %v2085 = vrot.slane %v2060, %v2084
        %v2087 = vadd.f32 %v2080, %v2085
        %2088 = vst.msk [vmem:[%s623] sm:$0xff] %vm643, %v2087
        %s2089 = sand.u32 %s410, 1
        %s2090 = scalar_lea.sflag [#allocation4], %s2089
        %s2091 = sand.u32 %s410, 1
        %s2092 = smul.addr %s2091, 8
        %s2093 = scalar_lea.vmem [#allocation8], %s2092
        %s2094 = sand.u32 %s436, 1
        %s2095 = scalar_lea.sflag [#allocation10], %s2094
        %s2096 = sand.u32 %s436, 1
        %s2097 = smul.addr %s2096, 32
        %s2098 = scalar_lea.vmem [#allocation9], %s2097
        // Predicated region
        $region101: #{tpu_custom_call.1} parent=87 // pred_check
          %p2099 = pneg %p420
        $region102: #{tpu_custom_call.1} parent=87 // pred_check_branch
          %2101 = sbr.rel (%p2099) target = $region104
        $region103: #{tpu_custom_call.1} parent=87 // pred_region
          %s2103 = ssub.s32 128, 128
          %2104 = vsyncadd %s2090, %s2103
          %s2105 = smul.addr %s40, 128
          %s2106 = scalar_lea.hbm %s17, %s2105
          %s2108 = sshll.u32 %s2093, 4
          %s2109 = int_to_ptr.vmem [resolvable:$true] %s2108
          %2111 = dma.vmem_to_hbm [thread:$0]  %s2109, 128, %s2106, %s2090
        $region104: #{tpu_custom_call.1} parent=87 // pred_fallthru
          _
        // Predicated region
        $region105: #{tpu_custom_call.1} parent=87 // pred_check
          %p2112 = pneg %p446
        $region106: #{tpu_custom_call.1} parent=87 // pred_check_branch
          %2114 = sbr.rel (%p2112) target = $region108
        $region107: #{tpu_custom_call.1} parent=87 // pred_region
          %s2116 = ssub.s32 512, 512
          %2117 = vsyncadd %s2095, %s2116
          %s2118 = smul.addr %s40, 4
          %s2119 = smul.addr %s2118, 128
          %s2120 = scalar_lea.hbm %s18, %s2119
          %s2121 = sshll.u32 %s2098, 4
          %s2122 = int_to_ptr.vmem [resolvable:$true] %s2121
          %2127 = dma.vmem_to_hbm [thread:$0]  %s2122, 512, %s2120, %s2095, 128, 128, 8
        $region108: #{tpu_custom_call.1} parent=87 // pred_fallthru
          _
      $region88: #{tpu_custom_call.1} parent=5 // pred_fallthru
        _
      %p2128 = scmp.le.s32.totalorder 2, %s35
      // Predicated region
      $region109: #{tpu_custom_call.1} parent=5 // pred_check
        %p2129 = pneg %p2128
      $region110: #{tpu_custom_call.1} parent=5 // pred_check_branch
        %2131 = sbr.rel (%p2129) target = $region112
      $region111: #{tpu_custom_call.1} parent=5 // pred_region
        %s2132 = ssub.s32 %s35, 2
        // Predicated region
        $region113: #{tpu_custom_call.1} parent=111 // pred_check
          %p2133 = pneg %p426
        $region114: #{tpu_custom_call.1} parent=111 // pred_check_branch
          %2135 = sbr.rel (%p2133) target = $region116
        $region115: #{tpu_custom_call.1} parent=111 // pred_region
          %s2136 = sand.u32 %s411, 1
          %s2137 = scalar_lea.sflag [#allocation4], %s2136
          %s2138 = sand.u32 %s411, 1
          %s2139 = smul.addr %s2138, 8
          %s2140 = scalar_lea.vmem [#allocation8], %s2139
          %2141 = dma.done %s2137, 128
        $region116: #{tpu_custom_call.1} parent=111 // pred_fallthru
          _
        // Predicated region
        $region117: #{tpu_custom_call.1} parent=111 // pred_check
          %p2142 = pneg %p452
        $region118: #{tpu_custom_call.1} parent=111 // pred_check_branch
          %2144 = sbr.rel (%p2142) target = $region120
        $region119: #{tpu_custom_call.1} parent=111 // pred_region
          %s2145 = sand.u32 %s437, 1
          %s2146 = scalar_lea.sflag [#allocation10], %s2145
          %s2147 = sand.u32 %s437, 1
          %s2148 = smul.addr %s2147, 32
          %s2149 = scalar_lea.vmem [#allocation9], %s2148
          %2150 = dma.done %s2146, 512
        $region120: #{tpu_custom_call.1} parent=111 // pred_fallthru
          _
      $region112: #{tpu_custom_call.1} parent=5 // pred_fallthru
        _
    $region6: #{tpu_custom_call.1} parent=1 // loop_footer
      %s39 = sadd.s32 1, %s35
    $region7: #{tpu_custom_call.1} parent=1 // loop_footer_branch
      %34 = sbr.rel target = $region3
    $region8: #{tpu_custom_call.1} parent=1 // loop_exit
      _
    %2151 = vsyncpa [#allocation3], 1
    %s2152 = scalar_lea.sflag [#allocation3], 1
    %2153 = vsyncpa %s2152, 1
    %2154 = vsyncpa [#allocation6], 1
    %2155 = vsyncpa [#allocation4], 1
    %s2156 = scalar_lea.sflag [#allocation4], 1
    %2157 = vsyncpa %s2156, 1
    %2158 = vsyncpa [#allocation10], 1
    %s2159 = scalar_lea.sflag [#allocation10], 1
    %2160 = vsyncpa %s2159, 1

</llo_original>
